<compile_context>
chip_gen: v6e
topology: v6e:2x2x1
jax: 0.10.0
libtpu: 0.0.40
codegen_flags: <defaults>
</compile_context>

<pallas_src>
import functools

import jax
import jax.numpy as jnp
from jax import lax
from jax.experimental import pallas as pl
from jax.experimental.pallas import tpu as pltpu


def _make_kernel(H, W, c_in, c_mid, c_out, c_max):
    HW = H * W
    taps = [(kh, kw) for kh in range(3) for kw in range(3)]

    def kernel(x_ref, m_ref, w1_ref, b1_ref, w2_ref, b2_ref, w3_ref, b3_ref,
               o_ref, act_ref, p_ref):
        # x_ref : (1, c_in, HW)      one batch element, NCHW with spatial flattened
        # m_ref : (9, HW)            0/1 border-validity mask per tap (f32)
        # wN_ref: (coutN, 9*c_max)   BN-scale-folded conv weights, im2col layout,
        #                            per-tap channel block zero-padded to c_max
        # bN_ref: (coutN, 1)         folded BN bias
        # o_ref : (1, c_out, HW)     final activation (lane-dense store)
        # act_ref: (c_max, HW)       current layer input (VMEM resident)
        # p_ref : (9*c_max, HW)      im2col patches, already in matmul layout

        def build_patches():
            xin = act_ref[...]                              # (c_max, HW), 1 load
            for t, (kh, kw) in enumerate(taps):
                off = (kh - 1) * W + (kw - 1)
                shift = (-off) % HW
                shifted = pltpu.roll(xin, shift, axis=1) if shift else xin
                # zero out-of-image positions; 8-aligned sublane offset, lane-dense
                p_ref[t * c_max:(t + 1) * c_max, :] = shifted * m_ref[t:t + 1, :]

        def conv_bn_relu(w_ref, b_ref):
            # (cout, 9*c_max) x (9*c_max, HW) -> (cout, HW), f32 accumulate on MXU.
            y = jnp.dot(w_ref[...], p_ref[...], preferred_element_type=jnp.float32)
            return jnp.maximum(y + b_ref[...], 0.0)

        # Layer 1: channel-pad the input to c_max.  The padded rows are zero AND
        # the matching weight rows are zero, so their contribution is exactly 0.
        if c_in < c_max:
            act_ref[c_in:, :] = jnp.zeros((c_max - c_in, HW), jnp.float32)
        act_ref[:c_in, :] = x_ref[0]
        build_patches()
        act_ref[...] = conv_bn_relu(w1_ref, b1_ref)          # c_mid == c_max

        # Layer 2.
        build_patches()
        act_ref[...] = conv_bn_relu(w2_ref, b2_ref)

        # Layer 3 -> lane-dense output store.
        build_patches()
        o_ref[0] = conv_bn_relu(w3_ref, b3_ref).astype(o_ref.dtype)

    return kernel


def conv2ds_pallas_nchw(x_flat, tap_masks, kernel_params, H, W):
    """Fused 3x(Conv3x3 s1 p1 + folded-BN + ReLU).

    x_flat: (N, C_in, H*W) float32 (NCHW with spatial flattened)
    tap_masks: (9, H*W) float32 border-validity masks
    kernel_params: [(w_mat (Cout, 9*Cmax), bias (Cout, 1))] * 3
    """
    N, c_in, HW = x_flat.shape
    (w1, b1), (w2, b2), (w3, b3) = kernel_params
    c_mid = w1.shape[0]
    c_out = w3.shape[0]
    c_max = max(c_in, c_mid)
    assert c_mid == c_max, "Conv2Ds layout assumes mid channels >= input channels"

    kernel = _make_kernel(H, W, c_in, c_mid, c_out, c_max)

    def full(shape):
        return pl.BlockSpec(shape, lambda n: (0, 0))

    return pl.pallas_call(
        kernel,
        out_shape=jax.ShapeDtypeStruct((N, c_out, HW), x_flat.dtype),
        grid=(N,),
        in_specs=[
            pl.BlockSpec((1, c_in, HW), lambda n: (n, 0, 0)),
            full(tap_masks.shape),
            full(w1.shape), full(b1.shape),
            full(w2.shape), full(b2.shape),
            full(w3.shape), full(b3.shape),
        ],
        out_specs=pl.BlockSpec((1, c_out, HW), lambda n: (n, 0, 0)),
        scratch_shapes=[
            pltpu.VMEM((c_max, HW), jnp.float32),        # current activation
            pltpu.VMEM((9 * c_max, HW), jnp.float32),    # im2col patches (K x HW)
        ],
        compiler_params=pltpu.CompilerParams(
            dimension_semantics=("parallel",)),
    )(x_flat, tap_masks, w1, b1, w2, b2, w3, b3)


def _make_tap_masks(H, W):
    """(9, H*W) 0/1 masks: tap (kh,kw) is valid where the shifted pixel is in-image."""
    row = jnp.repeat(jnp.arange(H, dtype=jnp.int32), W)
    col = jnp.tile(jnp.arange(W, dtype=jnp.int32), H)
    masks = []
    for kh in range(3):
        for kw in range(3):
            dh, dw = kh - 1, kw - 1
            m = ((row + dh >= 0) & (row + dh < H) &
                 (col + dw >= 0) & (col + dw < W))
            masks.append(m)
    return jnp.stack(masks).astype(jnp.float32)


def _fold_bn(conv_bias, gamma, beta, running_mean, running_var, eps=1e-5):
    scale = gamma / jnp.sqrt(running_var + eps)
    bias = beta + (conv_bias - running_mean) * scale
    return scale, bias


def _prep_kernel_params(params, c_max):
    """(w_hwio, scale, bias) -> (w_mat (Cout, 9*Cmax) with BN scale folded and
    per-tap channel blocks zero-padded to Cmax, bias column (Cout, 1))."""
    prepped = []
    for (w_hwio, scale, bias) in params:
        kh, kw, cin, cout = w_hwio.shape
        w_scaled = (w_hwio * scale).astype(jnp.float32)          # fold BN scale
        w_pad = jnp.zeros((kh, kw, c_max, cout), jnp.float32)
        w_pad = w_pad.at[:, :, :cin, :].set(w_scaled)
        w_mat = w_pad.reshape(kh * kw * c_max, cout).T           # (cout, 9*c_max)
        prepped.append((w_mat, bias.reshape(cout, 1).astype(jnp.float32)))
    return prepped


def init_params(key, inplanes):
    """Deterministic synthetic parameters matching Conv2Ds(inplanes) shapes."""
    mid = inplanes * 2
    layer_dims = [(inplanes, mid), (mid, mid), (mid, inplanes)]
    params = []
    for (cin, cout) in layer_dims:
        key, kw, kb, kg, kbe, km, kv = jax.random.split(key, 7)
        w_oihw = 0.1 * jax.random.normal(kw, (cout, cin, 3, 3), jnp.float32)
        w_hwio = jnp.transpose(w_oihw, (2, 3, 1, 0))  # OIHW -> HWIO
        conv_b = 0.1 * jax.random.normal(kb, (cout,), jnp.float32)
        gamma = 1.0 + 0.1 * jax.random.normal(kg, (cout,), jnp.float32)
        beta = 0.1 * jax.random.normal(kbe, (cout,), jnp.float32)
        rmean = 0.1 * jax.random.normal(km, (cout,), jnp.float32)
        rvar = jnp.abs(1.0 + 0.1 * jax.random.normal(kv, (cout,), jnp.float32))
        scale, bias = _fold_bn(conv_b, gamma, beta, rmean, rvar)
        params.append((w_hwio, scale, bias))
    return params


@jax.jit
def conv2ds_forward_nchw(x_nchw, params):
    # The kernel consumes/produces NCHW directly; only free trailing-dim reshapes.
    N, C, H, W = x_nchw.shape
    mid = params[0][0].shape[-1]
    c_max = max(C, mid)
    x_flat = x_nchw.reshape(N, C, H * W)
    kp = _prep_kernel_params(params, c_max)
    masks = _make_tap_masks(H, W)
    y = conv2ds_pallas_nchw(x_flat, masks, kp, H, W)
    return y.reshape(N, y.shape[1], H, W)


def _reference_forward_nchw(x_nchw, params):
    """Plain-JAX reference (lax conv, scale applied separately) for checking."""
    y = jnp.transpose(x_nchw, (0, 2, 3, 1))
    for (w_hwio, scale, bias) in params:
        y = lax.conv_general_dilated(
            y, w_hwio, window_strides=(1, 1), padding=((1, 1), (1, 1)),
            dimension_numbers=("NHWC", "HWIO", "NHWC"),
            precision=lax.Precision.HIGHEST)
        y = jnp.maximum(y * scale + bias, 0.0)
    return jnp.transpose(y, (0, 3, 1, 2))


if __name__ == "__main__":
    key = jax.random.PRNGKey(0)
    k_x, k_p = jax.random.split(key)

    inplanes = 4
    N, H, W = 2, 16, 16
    x_nchw = jax.random.normal(k_x, (N, inplanes, H, W), jnp.float32)

    params = init_params(k_p, inplanes)

    out = conv2ds_forward_nchw(x_nchw, params)
    out = jax.block_until_ready(out)

    assert out.shape == (N, inplanes, H, W), out.shape

    ref = jax.block_until_ready(_reference_forward_nchw(x_nchw, params))
    if not jnp.allclose(out, ref, atol=1e-3, rtol=1e-3):
        max_err = jnp.max(jnp.abs(out - ref))
        raise AssertionError(f"Pallas kernel mismatch vs reference, max|diff|={max_err}")

    print("KERNEL_OK")
</pallas_src>

<mosaic_0001>
module attributes {stable_mosaic.version = 11 : i64} {
  func.func @kernel(%arg0: i32, %arg1: memref<1x4x256xf32, #tpu.memory_space<vmem>>, %arg2: memref<9x256xf32, #tpu.memory_space<vmem>>, %arg3: memref<8x72xf32, #tpu.memory_space<vmem>>, %arg4: memref<8x1xf32, #tpu.memory_space<vmem>>, %arg5: memref<8x72xf32, #tpu.memory_space<vmem>>, %arg6: memref<8x1xf32, #tpu.memory_space<vmem>>, %arg7: memref<4x72xf32, #tpu.memory_space<vmem>>, %arg8: memref<4x1xf32, #tpu.memory_space<vmem>>, %arg9: memref<1x4x256xf32, #tpu.memory_space<vmem>>, %arg10: memref<8x256xf32, #tpu.memory_space<vmem>>, %arg11: memref<72x256xf32, #tpu.memory_space<vmem>>) attributes {dimension_semantics = [#tpu.dimension_semantics<parallel>], iteration_bounds = array<i64: 2>, scalar_prefetch = 0 : i64, scratch_operands = 2 : i64, tpu.core_type = #tpu.core_type<tc>, window_params = [{transform_indices = @transform_0, window_bounds = array<i64: 1, 4, 256>}, {pipeline_mode = #tpu.pipeline_mode<synchronous>, transform_indices = @transform_1, window_bounds = array<i64: 9, 256>}, {pipeline_mode = #tpu.pipeline_mode<synchronous>, transform_indices = @transform_2, window_bounds = array<i64: 8, 72>}, {pipeline_mode = #tpu.pipeline_mode<synchronous>, transform_indices = @transform_3, window_bounds = array<i64: 8, 1>}, {pipeline_mode = #tpu.pipeline_mode<synchronous>, transform_indices = @transform_4, window_bounds = array<i64: 8, 72>}, {pipeline_mode = #tpu.pipeline_mode<synchronous>, transform_indices = @transform_5, window_bounds = array<i64: 8, 1>}, {pipeline_mode = #tpu.pipeline_mode<synchronous>, transform_indices = @transform_6, window_bounds = array<i64: 4, 72>}, {pipeline_mode = #tpu.pipeline_mode<synchronous>, transform_indices = @transform_7, window_bounds = array<i64: 4, 1>}, {transform_indices = @transform_8, window_bounds = array<i64: 1, 4, 256>}]} {
    %cst = arith.constant 0.000000e+00 : f32
    %0 = vector.broadcast %cst : f32 to vector<4x256xf32>
    %c4 = arith.constant 4 : index
    %c0 = arith.constant 0 : index
    %1 = vector.load %arg10[%c4, %c0] : memref<8x256xf32, #tpu.memory_space<vmem>>, vector<4x256xf32>
    tpu.vector_store %arg10[%c4, %c0], %0 {strides = array<i32>} : memref<8x256xf32, #tpu.memory_space<vmem>>, vector<4x256xf32>,
    %c0_0 = arith.constant 0 : index
    %c0_1 = arith.constant 0 : index
    %c0_2 = arith.constant 0 : index
    %2 = vector.load %arg1[%c0_0, %c0_1, %c0_2] : memref<1x4x256xf32, #tpu.memory_space<vmem>>, vector<1x4x256xf32>
    %3 = vector.shape_cast %2 : vector<1x4x256xf32> to vector<4x256xf32>
    %c0_3 = arith.constant 0 : index
    %c0_4 = arith.constant 0 : index
    %4 = vector.load %arg10[%c0_3, %c0_4] : memref<8x256xf32, #tpu.memory_space<vmem>>, vector<4x256xf32>
    tpu.vector_store %arg10[%c0_3, %c0_4], %3 {strides = array<i32>} : memref<8x256xf32, #tpu.memory_space<vmem>>, vector<4x256xf32>,
    %c0_5 = arith.constant 0 : index
    %c0_6 = arith.constant 0 : index
    %5 = vector.load %arg10[%c0_5, %c0_6] : memref<8x256xf32, #tpu.memory_space<vmem>>, vector<8x256xf32>
    %c17_i32 = arith.constant 17 : i32
    %6 = tpu.dynamic_rotate %5 by %c17_i32 dim 1 : vector<8x256xf32>, i32 -> vector<8x256xf32>
    %c0_7 = arith.constant 0 : index
    %c0_8 = arith.constant 0 : index
    %7 = vector.load %arg2[%c0_7, %c0_8] : memref<9x256xf32, #tpu.memory_space<vmem>>, vector<1x256xf32>
    %8 = vector.broadcast %7 : vector<1x256xf32> to vector<8x256xf32>
    %9 = arith.mulf %6, %8 : vector<8x256xf32>
    %c0_9 = arith.constant 0 : index
    %c0_10 = arith.constant 0 : index
    %10 = vector.load %arg11[%c0_9, %c0_10] : memref<72x256xf32, #tpu.memory_space<vmem>>, vector<8x256xf32>
    tpu.vector_store %arg11[%c0_9, %c0_10], %9 {strides = array<i32>} : memref<72x256xf32, #tpu.memory_space<vmem>>, vector<8x256xf32>,
    %c16_i32 = arith.constant 16 : i32
    %11 = tpu.dynamic_rotate %5 by %c16_i32 dim 1 : vector<8x256xf32>, i32 -> vector<8x256xf32>
    %c1 = arith.constant 1 : index
    %c0_11 = arith.constant 0 : index
    %12 = vector.load %arg2[%c1, %c0_11] : memref<9x256xf32, #tpu.memory_space<vmem>>, vector<1x256xf32>
    %13 = vector.broadcast %12 : vector<1x256xf32> to vector<8x256xf32>
    %14 = arith.mulf %11, %13 : vector<8x256xf32>
    %c8 = arith.constant 8 : index
    %c0_12 = arith.constant 0 : index
    %15 = vector.load %arg11[%c8, %c0_12] : memref<72x256xf32, #tpu.memory_space<vmem>>, vector<8x256xf32>
    tpu.vector_store %arg11[%c8, %c0_12], %14 {strides = array<i32>} : memref<72x256xf32, #tpu.memory_space<vmem>>, vector<8x256xf32>,
    %c15_i32 = arith.constant 15 : i32
    %16 = tpu.dynamic_rotate %5 by %c15_i32 dim 1 : vector<8x256xf32>, i32 -> vector<8x256xf32>
    %c2 = arith.constant 2 : index
    %c0_13 = arith.constant 0 : index
    %17 = vector.load %arg2[%c2, %c0_13] : memref<9x256xf32, #tpu.memory_space<vmem>>, vector<1x256xf32>
    %18 = vector.broadcast %17 : vector<1x256xf32> to vector<8x256xf32>
    %19 = arith.mulf %16, %18 : vector<8x256xf32>
    %c16 = arith.constant 16 : index
    %c0_14 = arith.constant 0 : index
    %20 = vector.load %arg11[%c16, %c0_14] : memref<72x256xf32, #tpu.memory_space<vmem>>, vector<8x256xf32>
    tpu.vector_store %arg11[%c16, %c0_14], %19 {strides = array<i32>} : memref<72x256xf32, #tpu.memory_space<vmem>>, vector<8x256xf32>,
    %c1_i32 = arith.constant 1 : i32
    %21 = tpu.dynamic_rotate %5 by %c1_i32 dim 1 : vector<8x256xf32>, i32 -> vector<8x256xf32>
    %c3 = arith.constant 3 : index
    %c0_15 = arith.constant 0 : index
    %22 = vector.load %arg2[%c3, %c0_15] : memref<9x256xf32, #tpu.memory_space<vmem>>, vector<1x256xf32>
    %23 = vector.broadcast %22 : vector<1x256xf32> to vector<8x256xf32>
    %24 = arith.mulf %21, %23 : vector<8x256xf32>
    %c24 = arith.constant 24 : index
    %c0_16 = arith.constant 0 : index
    %25 = vector.load %arg11[%c24, %c0_16] : memref<72x256xf32, #tpu.memory_space<vmem>>, vector<8x256xf32>
    tpu.vector_store %arg11[%c24, %c0_16], %24 {strides = array<i32>} : memref<72x256xf32, #tpu.memory_space<vmem>>, vector<8x256xf32>,
    %c4_17 = arith.constant 4 : index
    %c0_18 = arith.constant 0 : index
    %26 = vector.load %arg2[%c4_17, %c0_18] : memref<9x256xf32, #tpu.memory_space<vmem>>, vector<1x256xf32>
    %27 = vector.broadcast %26 : vector<1x256xf32> to vector<8x256xf32>
    %28 = arith.mulf %5, %27 : vector<8x256xf32>
    %c32 = arith.constant 32 : index
    %c0_19 = arith.constant 0 : index
    %29 = vector.load %arg11[%c32, %c0_19] : memref<72x256xf32, #tpu.memory_space<vmem>>, vector<8x256xf32>
    tpu.vector_store %arg11[%c32, %c0_19], %28 {strides = array<i32>} : memref<72x256xf32, #tpu.memory_space<vmem>>, vector<8x256xf32>,
    %c255_i32 = arith.constant 255 : i32
    %30 = tpu.dynamic_rotate %5 by %c255_i32 dim 1 : vector<8x256xf32>, i32 -> vector<8x256xf32>
    %c5 = arith.constant 5 : index
    %c0_20 = arith.constant 0 : index
    %31 = vector.load %arg2[%c5, %c0_20] : memref<9x256xf32, #tpu.memory_space<vmem>>, vector<1x256xf32>
    %32 = vector.broadcast %31 : vector<1x256xf32> to vector<8x256xf32>
    %33 = arith.mulf %30, %32 : vector<8x256xf32>
    %c40 = arith.constant 40 : index
    %c0_21 = arith.constant 0 : index
    %34 = vector.load %arg11[%c40, %c0_21] : memref<72x256xf32, #tpu.memory_space<vmem>>, vector<8x256xf32>
    tpu.vector_store %arg11[%c40, %c0_21], %33 {strides = array<i32>} : memref<72x256xf32, #tpu.memory_space<vmem>>, vector<8x256xf32>,
    %c241_i32 = arith.constant 241 : i32
    %35 = tpu.dynamic_rotate %5 by %c241_i32 dim 1 : vector<8x256xf32>, i32 -> vector<8x256xf32>
    %c6 = arith.constant 6 : index
    %c0_22 = arith.constant 0 : index
    %36 = vector.load %arg2[%c6, %c0_22] : memref<9x256xf32, #tpu.memory_space<vmem>>, vector<1x256xf32>
    %37 = vector.broadcast %36 : vector<1x256xf32> to vector<8x256xf32>
    %38 = arith.mulf %35, %37 : vector<8x256xf32>
    %c48 = arith.constant 48 : index
    %c0_23 = arith.constant 0 : index
    %39 = vector.load %arg11[%c48, %c0_23] : memref<72x256xf32, #tpu.memory_space<vmem>>, vector<8x256xf32>
    tpu.vector_store %arg11[%c48, %c0_23], %38 {strides = array<i32>} : memref<72x256xf32, #tpu.memory_space<vmem>>, vector<8x256xf32>,
    %c240_i32 = arith.constant 240 : i32
    %40 = tpu.dynamic_rotate %5 by %c240_i32 dim 1 : vector<8x256xf32>, i32 -> vector<8x256xf32>
    %c7 = arith.constant 7 : index
    %c0_24 = arith.constant 0 : index
    %41 = vector.load %arg2[%c7, %c0_24] : memref<9x256xf32, #tpu.memory_space<vmem>>, vector<1x256xf32>
    %42 = vector.broadcast %41 : vector<1x256xf32> to vector<8x256xf32>
    %43 = arith.mulf %40, %42 : vector<8x256xf32>
    %c56 = arith.constant 56 : index
    %c0_25 = arith.constant 0 : index
    %44 = vector.load %arg11[%c56, %c0_25] : memref<72x256xf32, #tpu.memory_space<vmem>>, vector<8x256xf32>
    tpu.vector_store %arg11[%c56, %c0_25], %43 {strides = array<i32>} : memref<72x256xf32, #tpu.memory_space<vmem>>, vector<8x256xf32>,
    %c239_i32 = arith.constant 239 : i32
    %45 = tpu.dynamic_rotate %5 by %c239_i32 dim 1 : vector<8x256xf32>, i32 -> vector<8x256xf32>
    %c8_26 = arith.constant 8 : index
    %c0_27 = arith.constant 0 : index
    %46 = vector.load %arg2[%c8_26, %c0_27] : memref<9x256xf32, #tpu.memory_space<vmem>>, vector<1x256xf32>
    %47 = vector.broadcast %46 : vector<1x256xf32> to vector<8x256xf32>
    %48 = arith.mulf %45, %47 : vector<8x256xf32>
    %c64 = arith.constant 64 : index
    %c0_28 = arith.constant 0 : index
    %49 = vector.load %arg11[%c64, %c0_28] : memref<72x256xf32, #tpu.memory_space<vmem>>, vector<8x256xf32>
    tpu.vector_store %arg11[%c64, %c0_28], %48 {strides = array<i32>} : memref<72x256xf32, #tpu.memory_space<vmem>>, vector<8x256xf32>,
    %c0_29 = arith.constant 0 : index
    %c0_30 = arith.constant 0 : index
    %50 = vector.load %arg3[%c0_29, %c0_30] : memref<8x72xf32, #tpu.memory_space<vmem>>, vector<8x72xf32>
    %c0_31 = arith.constant 0 : index
    %c0_32 = arith.constant 0 : index
    %51 = vector.load %arg11[%c0_31, %c0_32] : memref<72x256xf32, #tpu.memory_space<vmem>>, vector<72x256xf32>
    %cst_33 = arith.constant dense<0.000000e+00> : vector<8x256xf32>
    %52 = tpu.matmul %50, %51, %cst_33 {dimension_numbers = #tpu.dot_dimension_numbers<[1], [0], [0], [1], [0, 0, 1, 1], [], []>} : vector<8x72xf32>, vector<72x256xf32>, vector<8x256xf32> -> vector<8x256xf32>
    %c0_34 = arith.constant 0 : index
    %c0_35 = arith.constant 0 : index
    %53 = vector.load %arg4[%c0_34, %c0_35] : memref<8x1xf32, #tpu.memory_space<vmem>>, vector<8x1xf32>
    %54 = vector.broadcast %53 : vector<8x1xf32> to vector<8x256xf32>
    %55 = arith.addf %52, %54 : vector<8x256xf32>
    %cst_36 = arith.constant 0.000000e+00 : f32
    %56 = vector.broadcast %cst_36 : f32 to vector<8x256xf32>
    %57 = arith.maximumf %55, %56 : vector<8x256xf32>
    %c0_37 = arith.constant 0 : index
    %c0_38 = arith.constant 0 : index
    %58 = vector.load %arg10[%c0_37, %c0_38] : memref<8x256xf32, #tpu.memory_space<vmem>>, vector<8x256xf32>
    tpu.vector_store %arg10[%c0_37, %c0_38], %57 {strides = array<i32>} : memref<8x256xf32, #tpu.memory_space<vmem>>, vector<8x256xf32>,
    %c0_39 = arith.constant 0 : index
    %c0_40 = arith.constant 0 : index
    %59 = vector.load %arg10[%c0_39, %c0_40] : memref<8x256xf32, #tpu.memory_space<vmem>>, vector<8x256xf32>
    %c17_i32_41 = arith.constant 17 : i32
    %60 = tpu.dynamic_rotate %59 by %c17_i32_41 dim 1 : vector<8x256xf32>, i32 -> vector<8x256xf32>
    %c0_42 = arith.constant 0 : index
    %c0_43 = arith.constant 0 : index
    %61 = vector.load %arg2[%c0_42, %c0_43] : memref<9x256xf32, #tpu.memory_space<vmem>>, vector<1x256xf32>
    %62 = vector.broadcast %61 : vector<1x256xf32> to vector<8x256xf32>
    %63 = arith.mulf %60, %62 : vector<8x256xf32>
    %c0_44 = arith.constant 0 : index
    %c0_45 = arith.constant 0 : index
    %64 = vector.load %arg11[%c0_44, %c0_45] : memref<72x256xf32, #tpu.memory_space<vmem>>, vector<8x256xf32>
    tpu.vector_store %arg11[%c0_44, %c0_45], %63 {strides = array<i32>} : memref<72x256xf32, #tpu.memory_space<vmem>>, vector<8x256xf32>,
    %c16_i32_46 = arith.constant 16 : i32
    %65 = tpu.dynamic_rotate %59 by %c16_i32_46 dim 1 : vector<8x256xf32>, i32 -> vector<8x256xf32>
    %c1_47 = arith.constant 1 : index
    %c0_48 = arith.constant 0 : index
    %66 = vector.load %arg2[%c1_47, %c0_48] : memref<9x256xf32, #tpu.memory_space<vmem>>, vector<1x256xf32>
    %67 = vector.broadcast %66 : vector<1x256xf32> to vector<8x256xf32>
    %68 = arith.mulf %65, %67 : vector<8x256xf32>
    %c8_49 = arith.constant 8 : index
    %c0_50 = arith.constant 0 : index
    %69 = vector.load %arg11[%c8_49, %c0_50] : memref<72x256xf32, #tpu.memory_space<vmem>>, vector<8x256xf32>
    tpu.vector_store %arg11[%c8_49, %c0_50], %68 {strides = array<i32>} : memref<72x256xf32, #tpu.memory_space<vmem>>, vector<8x256xf32>,
    %c15_i32_51 = arith.constant 15 : i32
    %70 = tpu.dynamic_rotate %59 by %c15_i32_51 dim 1 : vector<8x256xf32>, i32 -> vector<8x256xf32>
    %c2_52 = arith.constant 2 : index
    %c0_53 = arith.constant 0 : index
    %71 = vector.load %arg2[%c2_52, %c0_53] : memref<9x256xf32, #tpu.memory_space<vmem>>, vector<1x256xf32>
    %72 = vector.broadcast %71 : vector<1x256xf32> to vector<8x256xf32>
    %73 = arith.mulf %70, %72 : vector<8x256xf32>
    %c16_54 = arith.constant 16 : index
    %c0_55 = arith.constant 0 : index
    %74 = vector.load %arg11[%c16_54, %c0_55] : memref<72x256xf32, #tpu.memory_space<vmem>>, vector<8x256xf32>
    tpu.vector_store %arg11[%c16_54, %c0_55], %73 {strides = array<i32>} : memref<72x256xf32, #tpu.memory_space<vmem>>, vector<8x256xf32>,
    %c1_i32_56 = arith.constant 1 : i32
    %75 = tpu.dynamic_rotate %59 by %c1_i32_56 dim 1 : vector<8x256xf32>, i32 -> vector<8x256xf32>
    %c3_57 = arith.constant 3 : index
    %c0_58 = arith.constant 0 : index
    %76 = vector.load %arg2[%c3_57, %c0_58] : memref<9x256xf32, #tpu.memory_space<vmem>>, vector<1x256xf32>
    %77 = vector.broadcast %76 : vector<1x256xf32> to vector<8x256xf32>
    %78 = arith.mulf %75, %77 : vector<8x256xf32>
    %c24_59 = arith.constant 24 : index
    %c0_60 = arith.constant 0 : index
    %79 = vector.load %arg11[%c24_59, %c0_60] : memref<72x256xf32, #tpu.memory_space<vmem>>, vector<8x256xf32>
    tpu.vector_store %arg11[%c24_59, %c0_60], %78 {strides = array<i32>} : memref<72x256xf32, #tpu.memory_space<vmem>>, vector<8x256xf32>,
    %c4_61 = arith.constant 4 : index
    %c0_62 = arith.constant 0 : index
    %80 = vector.load %arg2[%c4_61, %c0_62] : memref<9x256xf32, #tpu.memory_space<vmem>>, vector<1x256xf32>
    %81 = vector.broadcast %80 : vector<1x256xf32> to vector<8x256xf32>
    %82 = arith.mulf %59, %81 : vector<8x256xf32>
    %c32_63 = arith.constant 32 : index
    %c0_64 = arith.constant 0 : index
    %83 = vector.load %arg11[%c32_63, %c0_64] : memref<72x256xf32, #tpu.memory_space<vmem>>, vector<8x256xf32>
    tpu.vector_store %arg11[%c32_63, %c0_64], %82 {strides = array<i32>} : memref<72x256xf32, #tpu.memory_space<vmem>>, vector<8x256xf32>,
    %c255_i32_65 = arith.constant 255 : i32
    %84 = tpu.dynamic_rotate %59 by %c255_i32_65 dim 1 : vector<8x256xf32>, i32 -> vector<8x256xf32>
    %c5_66 = arith.constant 5 : index
    %c0_67 = arith.constant 0 : index
    %85 = vector.load %arg2[%c5_66, %c0_67] : memref<9x256xf32, #tpu.memory_space<vmem>>, vector<1x256xf32>
    %86 = vector.broadcast %85 : vector<1x256xf32> to vector<8x256xf32>
    %87 = arith.mulf %84, %86 : vector<8x256xf32>
    %c40_68 = arith.constant 40 : index
    %c0_69 = arith.constant 0 : index
    %88 = vector.load %arg11[%c40_68, %c0_69] : memref<72x256xf32, #tpu.memory_space<vmem>>, vector<8x256xf32>
    tpu.vector_store %arg11[%c40_68, %c0_69], %87 {strides = array<i32>} : memref<72x256xf32, #tpu.memory_space<vmem>>, vector<8x256xf32>,
    %c241_i32_70 = arith.constant 241 : i32
    %89 = tpu.dynamic_rotate %59 by %c241_i32_70 dim 1 : vector<8x256xf32>, i32 -> vector<8x256xf32>
    %c6_71 = arith.constant 6 : index
    %c0_72 = arith.constant 0 : index
    %90 = vector.load %arg2[%c6_71, %c0_72] : memref<9x256xf32, #tpu.memory_space<vmem>>, vector<1x256xf32>
    %91 = vector.broadcast %90 : vector<1x256xf32> to vector<8x256xf32>
    %92 = arith.mulf %89, %91 : vector<8x256xf32>
    %c48_73 = arith.constant 48 : index
    %c0_74 = arith.constant 0 : index
    %93 = vector.load %arg11[%c48_73, %c0_74] : memref<72x256xf32, #tpu.memory_space<vmem>>, vector<8x256xf32>
    tpu.vector_store %arg11[%c48_73, %c0_74], %92 {strides = array<i32>} : memref<72x256xf32, #tpu.memory_space<vmem>>, vector<8x256xf32>,
    %c240_i32_75 = arith.constant 240 : i32
    %94 = tpu.dynamic_rotate %59 by %c240_i32_75 dim 1 : vector<8x256xf32>, i32 -> vector<8x256xf32>
    %c7_76 = arith.constant 7 : index
    %c0_77 = arith.constant 0 : index
    %95 = vector.load %arg2[%c7_76, %c0_77] : memref<9x256xf32, #tpu.memory_space<vmem>>, vector<1x256xf32>
    %96 = vector.broadcast %95 : vector<1x256xf32> to vector<8x256xf32>
    %97 = arith.mulf %94, %96 : vector<8x256xf32>
    %c56_78 = arith.constant 56 : index
    %c0_79 = arith.constant 0 : index
    %98 = vector.load %arg11[%c56_78, %c0_79] : memref<72x256xf32, #tpu.memory_space<vmem>>, vector<8x256xf32>
    tpu.vector_store %arg11[%c56_78, %c0_79], %97 {strides = array<i32>} : memref<72x256xf32, #tpu.memory_space<vmem>>, vector<8x256xf32>,
    %c239_i32_80 = arith.constant 239 : i32
    %99 = tpu.dynamic_rotate %59 by %c239_i32_80 dim 1 : vector<8x256xf32>, i32 -> vector<8x256xf32>
    %c8_81 = arith.constant 8 : index
    %c0_82 = arith.constant 0 : index
    %100 = vector.load %arg2[%c8_81, %c0_82] : memref<9x256xf32, #tpu.memory_space<vmem>>, vector<1x256xf32>
    %101 = vector.broadcast %100 : vector<1x256xf32> to vector<8x256xf32>
    %102 = arith.mulf %99, %101 : vector<8x256xf32>
    %c64_83 = arith.constant 64 : index
    %c0_84 = arith.constant 0 : index
    %103 = vector.load %arg11[%c64_83, %c0_84] : memref<72x256xf32, #tpu.memory_space<vmem>>, vector<8x256xf32>
    tpu.vector_store %arg11[%c64_83, %c0_84], %102 {strides = array<i32>} : memref<72x256xf32, #tpu.memory_space<vmem>>, vector<8x256xf32>,
    %c0_85 = arith.constant 0 : index
    %c0_86 = arith.constant 0 : index
    %104 = vector.load %arg5[%c0_85, %c0_86] : memref<8x72xf32, #tpu.memory_space<vmem>>, vector<8x72xf32>
    %c0_87 = arith.constant 0 : index
    %c0_88 = arith.constant 0 : index
    %105 = vector.load %arg11[%c0_87, %c0_88] : memref<72x256xf32, #tpu.memory_space<vmem>>, vector<72x256xf32>
    %cst_89 = arith.constant dense<0.000000e+00> : vector<8x256xf32>
    %106 = tpu.matmul %104, %105, %cst_89 {dimension_numbers = #tpu.dot_dimension_numbers<[1], [0], [0], [1], [0, 0, 1, 1], [], []>} : vector<8x72xf32>, vector<72x256xf32>, vector<8x256xf32> -> vector<8x256xf32>
    %c0_90 = arith.constant 0 : index
    %c0_91 = arith.constant 0 : index
    %107 = vector.load %arg6[%c0_90, %c0_91] : memref<8x1xf32, #tpu.memory_space<vmem>>, vector<8x1xf32>
    %108 = vector.broadcast %107 : vector<8x1xf32> to vector<8x256xf32>
    %109 = arith.addf %106, %108 : vector<8x256xf32>
    %cst_92 = arith.constant 0.000000e+00 : f32
    %110 = vector.broadcast %cst_92 : f32 to vector<8x256xf32>
    %111 = arith.maximumf %109, %110 : vector<8x256xf32>
    %c0_93 = arith.constant 0 : index
    %c0_94 = arith.constant 0 : index
    %112 = vector.load %arg10[%c0_93, %c0_94] : memref<8x256xf32, #tpu.memory_space<vmem>>, vector<8x256xf32>
    tpu.vector_store %arg10[%c0_93, %c0_94], %111 {strides = array<i32>} : memref<8x256xf32, #tpu.memory_space<vmem>>, vector<8x256xf32>,
    %c0_95 = arith.constant 0 : index
    %c0_96 = arith.constant 0 : index
    %113 = vector.load %arg10[%c0_95, %c0_96] : memref<8x256xf32, #tpu.memory_space<vmem>>, vector<8x256xf32>
    %c17_i32_97 = arith.constant 17 : i32
    %114 = tpu.dynamic_rotate %113 by %c17_i32_97 dim 1 : vector<8x256xf32>, i32 -> vector<8x256xf32>
    %c0_98 = arith.constant 0 : index
    %c0_99 = arith.constant 0 : index
    %115 = vector.load %arg2[%c0_98, %c0_99] : memref<9x256xf32, #tpu.memory_space<vmem>>, vector<1x256xf32>
    %116 = vector.broadcast %115 : vector<1x256xf32> to vector<8x256xf32>
    %117 = arith.mulf %114, %116 : vector<8x256xf32>
    %c0_100 = arith.constant 0 : index
    %c0_101 = arith.constant 0 : index
    %118 = vector.load %arg11[%c0_100, %c0_101] : memref<72x256xf32, #tpu.memory_space<vmem>>, vector<8x256xf32>
    tpu.vector_store %arg11[%c0_100, %c0_101], %117 {strides = array<i32>} : memref<72x256xf32, #tpu.memory_space<vmem>>, vector<8x256xf32>,
    %c16_i32_102 = arith.constant 16 : i32
    %119 = tpu.dynamic_rotate %113 by %c16_i32_102 dim 1 : vector<8x256xf32>, i32 -> vector<8x256xf32>
    %c1_103 = arith.constant 1 : index
    %c0_104 = arith.constant 0 : index
    %120 = vector.load %arg2[%c1_103, %c0_104] : memref<9x256xf32, #tpu.memory_space<vmem>>, vector<1x256xf32>
    %121 = vector.broadcast %120 : vector<1x256xf32> to vector<8x256xf32>
    %122 = arith.mulf %119, %121 : vector<8x256xf32>
    %c8_105 = arith.constant 8 : index
    %c0_106 = arith.constant 0 : index
    %123 = vector.load %arg11[%c8_105, %c0_106] : memref<72x256xf32, #tpu.memory_space<vmem>>, vector<8x256xf32>
    tpu.vector_store %arg11[%c8_105, %c0_106], %122 {strides = array<i32>} : memref<72x256xf32, #tpu.memory_space<vmem>>, vector<8x256xf32>,
    %c15_i32_107 = arith.constant 15 : i32
    %124 = tpu.dynamic_rotate %113 by %c15_i32_107 dim 1 : vector<8x256xf32>, i32 -> vector<8x256xf32>
    %c2_108 = arith.constant 2 : index
    %c0_109 = arith.constant 0 : index
    %125 = vector.load %arg2[%c2_108, %c0_109] : memref<9x256xf32, #tpu.memory_space<vmem>>, vector<1x256xf32>
    %126 = vector.broadcast %125 : vector<1x256xf32> to vector<8x256xf32>
    %127 = arith.mulf %124, %126 : vector<8x256xf32>
    %c16_110 = arith.constant 16 : index
    %c0_111 = arith.constant 0 : index
    %128 = vector.load %arg11[%c16_110, %c0_111] : memref<72x256xf32, #tpu.memory_space<vmem>>, vector<8x256xf32>
    tpu.vector_store %arg11[%c16_110, %c0_111], %127 {strides = array<i32>} : memref<72x256xf32, #tpu.memory_space<vmem>>, vector<8x256xf32>,
    %c1_i32_112 = arith.constant 1 : i32
    %129 = tpu.dynamic_rotate %113 by %c1_i32_112 dim 1 : vector<8x256xf32>, i32 -> vector<8x256xf32>
    %c3_113 = arith.constant 3 : index
    %c0_114 = arith.constant 0 : index
    %130 = vector.load %arg2[%c3_113, %c0_114] : memref<9x256xf32, #tpu.memory_space<vmem>>, vector<1x256xf32>
    %131 = vector.broadcast %130 : vector<1x256xf32> to vector<8x256xf32>
    %132 = arith.mulf %129, %131 : vector<8x256xf32>
    %c24_115 = arith.constant 24 : index
    %c0_116 = arith.constant 0 : index
    %133 = vector.load %arg11[%c24_115, %c0_116] : memref<72x256xf32, #tpu.memory_space<vmem>>, vector<8x256xf32>
    tpu.vector_store %arg11[%c24_115, %c0_116], %132 {strides = array<i32>} : memref<72x256xf32, #tpu.memory_space<vmem>>, vector<8x256xf32>,
    %c4_117 = arith.constant 4 : index
    %c0_118 = arith.constant 0 : index
    %134 = vector.load %arg2[%c4_117, %c0_118] : memref<9x256xf32, #tpu.memory_space<vmem>>, vector<1x256xf32>
    %135 = vector.broadcast %134 : vector<1x256xf32> to vector<8x256xf32>
    %136 = arith.mulf %113, %135 : vector<8x256xf32>
    %c32_119 = arith.constant 32 : index
    %c0_120 = arith.constant 0 : index
    %137 = vector.load %arg11[%c32_119, %c0_120] : memref<72x256xf32, #tpu.memory_space<vmem>>, vector<8x256xf32>
    tpu.vector_store %arg11[%c32_119, %c0_120], %136 {strides = array<i32>} : memref<72x256xf32, #tpu.memory_space<vmem>>, vector<8x256xf32>,
    %c255_i32_121 = arith.constant 255 : i32
    %138 = tpu.dynamic_rotate %113 by %c255_i32_121 dim 1 : vector<8x256xf32>, i32 -> vector<8x256xf32>
    %c5_122 = arith.constant 5 : index
    %c0_123 = arith.constant 0 : index
    %139 = vector.load %arg2[%c5_122, %c0_123] : memref<9x256xf32, #tpu.memory_space<vmem>>, vector<1x256xf32>
    %140 = vector.broadcast %139 : vector<1x256xf32> to vector<8x256xf32>
    %141 = arith.mulf %138, %140 : vector<8x256xf32>
    %c40_124 = arith.constant 40 : index
    %c0_125 = arith.constant 0 : index
    %142 = vector.load %arg11[%c40_124, %c0_125] : memref<72x256xf32, #tpu.memory_space<vmem>>, vector<8x256xf32>
    tpu.vector_store %arg11[%c40_124, %c0_125], %141 {strides = array<i32>} : memref<72x256xf32, #tpu.memory_space<vmem>>, vector<8x256xf32>,
    %c241_i32_126 = arith.constant 241 : i32
    %143 = tpu.dynamic_rotate %113 by %c241_i32_126 dim 1 : vector<8x256xf32>, i32 -> vector<8x256xf32>
    %c6_127 = arith.constant 6 : index
    %c0_128 = arith.constant 0 : index
    %144 = vector.load %arg2[%c6_127, %c0_128] : memref<9x256xf32, #tpu.memory_space<vmem>>, vector<1x256xf32>
    %145 = vector.broadcast %144 : vector<1x256xf32> to vector<8x256xf32>
    %146 = arith.mulf %143, %145 : vector<8x256xf32>
    %c48_129 = arith.constant 48 : index
    %c0_130 = arith.constant 0 : index
    %147 = vector.load %arg11[%c48_129, %c0_130] : memref<72x256xf32, #tpu.memory_space<vmem>>, vector<8x256xf32>
    tpu.vector_store %arg11[%c48_129, %c0_130], %146 {strides = array<i32>} : memref<72x256xf32, #tpu.memory_space<vmem>>, vector<8x256xf32>,
    %c240_i32_131 = arith.constant 240 : i32
    %148 = tpu.dynamic_rotate %113 by %c240_i32_131 dim 1 : vector<8x256xf32>, i32 -> vector<8x256xf32>
    %c7_132 = arith.constant 7 : index
    %c0_133 = arith.constant 0 : index
    %149 = vector.load %arg2[%c7_132, %c0_133] : memref<9x256xf32, #tpu.memory_space<vmem>>, vector<1x256xf32>
    %150 = vector.broadcast %149 : vector<1x256xf32> to vector<8x256xf32>
    %151 = arith.mulf %148, %150 : vector<8x256xf32>
    %c56_134 = arith.constant 56 : index
    %c0_135 = arith.constant 0 : index
    %152 = vector.load %arg11[%c56_134, %c0_135] : memref<72x256xf32, #tpu.memory_space<vmem>>, vector<8x256xf32>
    tpu.vector_store %arg11[%c56_134, %c0_135], %151 {strides = array<i32>} : memref<72x256xf32, #tpu.memory_space<vmem>>, vector<8x256xf32>,
    %c239_i32_136 = arith.constant 239 : i32
    %153 = tpu.dynamic_rotate %113 by %c239_i32_136 dim 1 : vector<8x256xf32>, i32 -> vector<8x256xf32>
    %c8_137 = arith.constant 8 : index
    %c0_138 = arith.constant 0 : index
    %154 = vector.load %arg2[%c8_137, %c0_138] : memref<9x256xf32, #tpu.memory_space<vmem>>, vector<1x256xf32>
    %155 = vector.broadcast %154 : vector<1x256xf32> to vector<8x256xf32>
    %156 = arith.mulf %153, %155 : vector<8x256xf32>
    %c64_139 = arith.constant 64 : index
    %c0_140 = arith.constant 0 : index
    %157 = vector.load %arg11[%c64_139, %c0_140] : memref<72x256xf32, #tpu.memory_space<vmem>>, vector<8x256xf32>
    tpu.vector_store %arg11[%c64_139, %c0_140], %156 {strides = array<i32>} : memref<72x256xf32, #tpu.memory_space<vmem>>, vector<8x256xf32>,
    %c0_141 = arith.constant 0 : index
    %c0_142 = arith.constant 0 : index
    %158 = vector.load %arg7[%c0_141, %c0_142] : memref<4x72xf32, #tpu.memory_space<vmem>>, vector<4x72xf32>
    %c0_143 = arith.constant 0 : index
    %c0_144 = arith.constant 0 : index
    %159 = vector.load %arg11[%c0_143, %c0_144] : memref<72x256xf32, #tpu.memory_space<vmem>>, vector<72x256xf32>
    %cst_145 = arith.constant dense<0.000000e+00> : vector<4x256xf32>
    %160 = tpu.matmul %158, %159, %cst_145 {dimension_numbers = #tpu.dot_dimension_numbers<[1], [0], [0], [1], [0, 0, 1, 1], [], []>} : vector<4x72xf32>, vector<72x256xf32>, vector<4x256xf32> -> vector<4x256xf32>
    %c0_146 = arith.constant 0 : index
    %c0_147 = arith.constant 0 : index
    %161 = vector.load %arg8[%c0_146, %c0_147] : memref<4x1xf32, #tpu.memory_space<vmem>>, vector<4x1xf32>
    %162 = vector.broadcast %161 : vector<4x1xf32> to vector<4x256xf32>
    %163 = arith.addf %160, %162 : vector<4x256xf32>
    %cst_148 = arith.constant 0.000000e+00 : f32
    %164 = vector.broadcast %cst_148 : f32 to vector<4x256xf32>
    %165 = arith.maximumf %163, %164 : vector<4x256xf32>
    %c0_149 = arith.constant 0 : index
    %c0_150 = arith.constant 0 : index
    %c0_151 = arith.constant 0 : index
    %166 = vector.load %arg9[%c0_149, %c0_150, %c0_151] : memref<1x4x256xf32, #tpu.memory_space<vmem>>, vector<1x4x256xf32>
    %167 = vector.shape_cast %166 : vector<1x4x256xf32> to vector<4x256xf32>
    %168 = vector.shape_cast %165 : vector<4x256xf32> to vector<1x4x256xf32>
    tpu.vector_store %arg9[%c0_149, %c0_150, %c0_151], %168 {strides = array<i32>} : memref<1x4x256xf32, #tpu.memory_space<vmem>>, vector<1x4x256xf32>,
    return
  }
  func.func @transform_0(%arg0: i32) -> (i32, i32, i32) {
    %c0_i32 = arith.constant 0 : i32
    %c0_i32_0 = arith.constant 0 : i32
    %c0_i32_1 = arith.constant 0 : i32
    return %arg0, %c0_i32, %c0_i32_0 : i32, i32, i32
  }
  func.func @transform_1(%arg0: i32) -> (i32, i32) {
    %c0_i32 = arith.constant 0 : i32
    %c0_i32_0 = arith.constant 0 : i32
    %c0_i32_1 = arith.constant 0 : i32
    return %c0_i32, %c0_i32_0 : i32, i32
  }
  func.func @transform_2(%arg0: i32) -> (i32, i32) {
    %c0_i32 = arith.constant 0 : i32
    %c0_i32_0 = arith.constant 0 : i32
    %c0_i32_1 = arith.constant 0 : i32
    return %c0_i32, %c0_i32_0 : i32, i32
  }
  func.func @transform_3(%arg0: i32) -> (i32, i32) {
    %c0_i32 = arith.constant 0 : i32
    %c0_i32_0 = arith.constant 0 : i32
    %c0_i32_1 = arith.constant 0 : i32
    return %c0_i32, %c0_i32_0 : i32, i32
  }
  func.func @transform_4(%arg0: i32) -> (i32, i32) {
    %c0_i32 = arith.constant 0 : i32
    %c0_i32_0 = arith.constant 0 : i32
    %c0_i32_1 = arith.constant 0 : i32
    return %c0_i32, %c0_i32_0 : i32, i32
  }
  func.func @transform_5(%arg0: i32) -> (i32, i32) {
    %c0_i32 = arith.constant 0 : i32
    %c0_i32_0 = arith.constant 0 : i32
    %c0_i32_1 = arith.constant 0 : i32
    return %c0_i32, %c0_i32_0 : i32, i32
  }
  func.func @transform_6(%arg0: i32) -> (i32, i32) {
    %c0_i32 = arith.constant 0 : i32
    %c0_i32_0 = arith.constant 0 : i32
    %c0_i32_1 = arith.constant 0 : i32
    return %c0_i32, %c0_i32_0 : i32, i32
  }
  func.func @transform_7(%arg0: i32) -> (i32, i32) {
    %c0_i32 = arith.constant 0 : i32
    %c0_i32_0 = arith.constant 0 : i32
    %c0_i32_1 = arith.constant 0 : i32
    return %c0_i32, %c0_i32_0 : i32, i32
  }
  func.func @transform_8(%arg0: i32) -> (i32, i32, i32) {
    %c0_i32 = arith.constant 0 : i32
    %c0_i32_0 = arith.constant 0 : i32
    %c0_i32_1 = arith.constant 0 : i32
    return %arg0, %c0_i32, %c0_i32_0 : i32, i32, i32
  }
}

</mosaic_0001>

<llo_original>
// kernel: conv2ds_forward_nchw.1
$region0: #{conv2ds_forward_nchw.1}
  #allocation0 [shape = 'u32[]', space=smem, size = 0x4, offset = 0x4, fixed_abs, tag = 'smem constant byte address 0x4 - core index']
  #allocation1 [shape = 'u32[144,128]{1,0:T(1,128)}', space=vmem, size = 0x12000, scoped, tag = 'internal scratch']
  #allocation2 [shape = 'f32[8,256]{1,0:T(8,128)}', space=vmem, size = 0x2000, scoped, tag = 'scratch operand']
  #allocation3 [shape = 'f32[72,256]{1,0:T(8,128)}', space=vmem, size = 0x12000, scoped, tag = 'scratch operand']
  %s0 = inlined_call_operand.vmem [shape: f32[2,4,256], index: 0, kind: input, shape index: {}]
  %s1 = inlined_call_operand.vmem [shape: f32[9,256], index: 1, kind: input, shape index: {}]
  %s2 = inlined_call_operand.vmem [shape: f32[8,72], index: 2, kind: input, shape index: {}]
  %s3 = inlined_call_operand.vmem [shape: f32[8,1], index: 3, kind: input, shape index: {}]
  %s4 = inlined_call_operand.vmem [shape: f32[8,72], index: 4, kind: input, shape index: {}]
  %s5 = inlined_call_operand.vmem [shape: f32[8,1], index: 5, kind: input, shape index: {}]
  %s6 = inlined_call_operand.vmem [shape: f32[4,72], index: 6, kind: input, shape index: {}]
  %s7 = inlined_call_operand.vmem [shape: f32[4,1], index: 7, kind: input, shape index: {}]
  %s8 = inlined_call_operand.vmem [shape: f32[2,4,256], index: 8, kind: output, shape index: {}]
  %s9 = sld [smem:[#allocation0]]
  $region65: #{conv2ds_forward_nchw.1} parent=0
    _
  %s11 = ssub.s32 1, %s9
  %s12 = scalar_select 0, %s11, %s9
  loop: start=0, step=1, limit=4
  $region2: #{conv2ds_forward_nchw.1} parent=0 // loop_pre_header
    _
  $region3: #{conv2ds_forward_nchw.1} parent=0 // loop_header
    %s14 = sphi 0, %s18
    %p15 = scmp.ge.s32.totalorder %s14, 4
    %s24 = sphi 0, %s26
    %s27 = sphi 0, %s24
    %s28 = sphi 0, %s27
    %s44 = sphi 0, %s28
    %s48 = sphi 0, %s48
    %s50 = sphi 0, %s48
    %s51 = sphi 0, %s50
    %s65 = sphi 0, %s51
    %s69 = sphi 0, %s69
    %s71 = sphi 0, %s69
    %s72 = sphi 0, %s71
    %s86 = sphi 0, %s72
    %s90 = sphi 0, %s90
    %s92 = sphi 0, %s90
    %s93 = sphi 0, %s92
    %s107 = sphi 0, %s93
    %s111 = sphi 0, %s111
    %s113 = sphi 0, %s111
    %s114 = sphi 0, %s113
    %s128 = sphi 0, %s114
    %s132 = sphi 0, %s132
    %s134 = sphi 0, %s132
    %s135 = sphi 0, %s134
    %s149 = sphi 0, %s135
    %s153 = sphi 0, %s153
    %s155 = sphi 0, %s153
    %s156 = sphi 0, %s155
    %s170 = sphi 0, %s156
    %s174 = sphi 0, %s174
    %s176 = sphi 0, %s174
    %s177 = sphi 0, %s176
    %s191 = sphi 0, %s177
    %s197 = sphi 0, %s199
    %s200 = sphi 0, %s197
    %s201 = sphi 0, %s200
    %s217 = sphi 0, %s201
  $region4: #{conv2ds_forward_nchw.1} parent=0 // loop_header_branch
    %17 = sbr.rel (%p15) target = $region8
  $region5: #{conv2ds_forward_nchw.1} parent=0 // loop_body
    %s19 = ssub.s32 %s14, 1
    %s20 = ssub.s32 %s14, 2
    %s21 = sadd.s32 %s14, 1
    %s22 = ssub.s32 %s14, %s21
    %p23 = scmp.eq.s32.totalorder %s22, 0
    %s25 = sadd.s32 %s24, 1
    %s26 = scalar_select %p23, %s24, %s25
    %p29 = pneg %p23
    %p30 = scmp.eq.s32.totalorder %s14, 1
    %p31 = por %p29, %p30
    %p32 = scmp.ne.s32.totalorder %s24, %s27
    %p33 = scmp.eq.s32.totalorder %s14, 0
    %p34 = por %p32, %p33
    %p35 = scmp.ne.s32.totalorder %s24, %s27
    %p36 = scmp.eq.s32.totalorder %s19, 1
    %p37 = por %p35, %p36
    %p38 = scmp.ne.s32.totalorder %s27, %s28
    %p39 = scmp.eq.s32.totalorder %s19, 0
    %p40 = por %p38, %p39
    %p41 = scmp.ne.s32.totalorder %s27, %s28
    %p42 = scmp.eq.s32.totalorder %s20, 1
    %p43 = por %p41, %p42
    %p45 = scmp.ne.s32.totalorder %s28, %s44
    %p46 = scmp.eq.s32.totalorder %s20, 0
    %p47 = por %p45, %p46
    %s49 = sadd.s32 %s48, 1
    %p52 = scmp.eq.s32.totalorder %s14, 1
    %p53 = scmp.ne.s32.totalorder %s48, %s50
    %p54 = scmp.eq.s32.totalorder %s14, 0
    %p55 = por %p53, %p54
    %p56 = scmp.ne.s32.totalorder %s48, %s50
    %p57 = scmp.eq.s32.totalorder %s19, 1
    %p58 = por %p56, %p57
    %p59 = scmp.ne.s32.totalorder %s50, %s51
    %p60 = scmp.eq.s32.totalorder %s19, 0
    %p61 = por %p59, %p60
    %p62 = scmp.ne.s32.totalorder %s50, %s51
    %p63 = scmp.eq.s32.totalorder %s20, 1
    %p64 = por %p62, %p63
    %p66 = scmp.ne.s32.totalorder %s51, %s65
    %p67 = scmp.eq.s32.totalorder %s20, 0
    %p68 = por %p66, %p67
    %s70 = sadd.s32 %s69, 1
    %p73 = scmp.eq.s32.totalorder %s14, 1
    %p74 = scmp.ne.s32.totalorder %s69, %s71
    %p75 = scmp.eq.s32.totalorder %s14, 0
    %p76 = por %p74, %p75
    %p77 = scmp.ne.s32.totalorder %s69, %s71
    %p78 = scmp.eq.s32.totalorder %s19, 1
    %p79 = por %p77, %p78
    %p80 = scmp.ne.s32.totalorder %s71, %s72
    %p81 = scmp.eq.s32.totalorder %s19, 0
    %p82 = por %p80, %p81
    %p83 = scmp.ne.s32.totalorder %s71, %s72
    %p84 = scmp.eq.s32.totalorder %s20, 1
    %p85 = por %p83, %p84
    %p87 = scmp.ne.s32.totalorder %s72, %s86
    %p88 = scmp.eq.s32.totalorder %s20, 0
    %p89 = por %p87, %p88
    %s91 = sadd.s32 %s90, 1
    %p94 = scmp.eq.s32.totalorder %s14, 1
    %p95 = scmp.ne.s32.totalorder %s90, %s92
    %p96 = scmp.eq.s32.totalorder %s14, 0
    %p97 = por %p95, %p96
    %p98 = scmp.ne.s32.totalorder %s90, %s92
    %p99 = scmp.eq.s32.totalorder %s19, 1
    %p100 = por %p98, %p99
    %p101 = scmp.ne.s32.totalorder %s92, %s93
    %p102 = scmp.eq.s32.totalorder %s19, 0
    %p103 = por %p101, %p102
    %p104 = scmp.ne.s32.totalorder %s92, %s93
    %p105 = scmp.eq.s32.totalorder %s20, 1
    %p106 = por %p104, %p105
    %p108 = scmp.ne.s32.totalorder %s93, %s107
    %p109 = scmp.eq.s32.totalorder %s20, 0
    %p110 = por %p108, %p109
    %s112 = sadd.s32 %s111, 1
    %p115 = scmp.eq.s32.totalorder %s14, 1
    %p116 = scmp.ne.s32.totalorder %s111, %s113
    %p117 = scmp.eq.s32.totalorder %s14, 0
    %p118 = por %p116, %p117
    %p119 = scmp.ne.s32.totalorder %s111, %s113
    %p120 = scmp.eq.s32.totalorder %s19, 1
    %p121 = por %p119, %p120
    %p122 = scmp.ne.s32.totalorder %s113, %s114
    %p123 = scmp.eq.s32.totalorder %s19, 0
    %p124 = por %p122, %p123
    %p125 = scmp.ne.s32.totalorder %s113, %s114
    %p126 = scmp.eq.s32.totalorder %s20, 1
    %p127 = por %p125, %p126
    %p129 = scmp.ne.s32.totalorder %s114, %s128
    %p130 = scmp.eq.s32.totalorder %s20, 0
    %p131 = por %p129, %p130
    %s133 = sadd.s32 %s132, 1
    %p136 = scmp.eq.s32.totalorder %s14, 1
    %p137 = scmp.ne.s32.totalorder %s132, %s134
    %p138 = scmp.eq.s32.totalorder %s14, 0
    %p139 = por %p137, %p138
    %p140 = scmp.ne.s32.totalorder %s132, %s134
    %p141 = scmp.eq.s32.totalorder %s19, 1
    %p142 = por %p140, %p141
    %p143 = scmp.ne.s32.totalorder %s134, %s135
    %p144 = scmp.eq.s32.totalorder %s19, 0
    %p145 = por %p143, %p144
    %p146 = scmp.ne.s32.totalorder %s134, %s135
    %p147 = scmp.eq.s32.totalorder %s20, 1
    %p148 = por %p146, %p147
    %p150 = scmp.ne.s32.totalorder %s135, %s149
    %p151 = scmp.eq.s32.totalorder %s20, 0
    %p152 = por %p150, %p151
    %s154 = sadd.s32 %s153, 1
    %p157 = scmp.eq.s32.totalorder %s14, 1
    %p158 = scmp.ne.s32.totalorder %s153, %s155
    %p159 = scmp.eq.s32.totalorder %s14, 0
    %p160 = por %p158, %p159
    %p161 = scmp.ne.s32.totalorder %s153, %s155
    %p162 = scmp.eq.s32.totalorder %s19, 1
    %p163 = por %p161, %p162
    %p164 = scmp.ne.s32.totalorder %s155, %s156
    %p165 = scmp.eq.s32.totalorder %s19, 0
    %p166 = por %p164, %p165
    %p167 = scmp.ne.s32.totalorder %s155, %s156
    %p168 = scmp.eq.s32.totalorder %s20, 1
    %p169 = por %p167, %p168
    %p171 = scmp.ne.s32.totalorder %s156, %s170
    %p172 = scmp.eq.s32.totalorder %s20, 0
    %p173 = por %p171, %p172
    %s175 = sadd.s32 %s174, 1
    %p178 = scmp.eq.s32.totalorder %s14, 1
    %p179 = scmp.ne.s32.totalorder %s174, %s176
    %p180 = scmp.eq.s32.totalorder %s14, 0
    %p181 = por %p179, %p180
    %p182 = scmp.ne.s32.totalorder %s174, %s176
    %p183 = scmp.eq.s32.totalorder %s19, 1
    %p184 = por %p182, %p183
    %p185 = scmp.ne.s32.totalorder %s176, %s177
    %p186 = scmp.eq.s32.totalorder %s19, 0
    %p187 = por %p185, %p186
    %p188 = scmp.ne.s32.totalorder %s176, %s177
    %p189 = scmp.eq.s32.totalorder %s20, 1
    %p190 = por %p188, %p189
    %p192 = scmp.ne.s32.totalorder %s177, %s191
    %p193 = scmp.eq.s32.totalorder %s20, 0
    %p194 = por %p192, %p193
    %s195 = ssub.s32 %s14, %s21
    %p196 = scmp.eq.s32.totalorder %s195, 0
    %s198 = sadd.s32 %s197, 1
    %s199 = scalar_select %p196, %s197, %s198
    %p202 = pneg %p196
    %p203 = scmp.eq.s32.totalorder %s14, 1
    %p204 = por %p202, %p203
    %p205 = scmp.ne.s32.totalorder %s197, %s200
    %p206 = scmp.eq.s32.totalorder %s14, 0
    %p207 = por %p205, %p206
    %p208 = scmp.ne.s32.totalorder %s197, %s200
    %p209 = scmp.eq.s32.totalorder %s19, 1
    %p210 = por %p208, %p209
    %p211 = scmp.ne.s32.totalorder %s200, %s201
    %p212 = scmp.eq.s32.totalorder %s19, 0
    %p213 = por %p211, %p212
    %p214 = scmp.ne.s32.totalorder %s200, %s201
    %p215 = scmp.eq.s32.totalorder %s20, 1
    %p216 = por %p214, %p215
    %p218 = scmp.ne.s32.totalorder %s201, %s217
    %p219 = scmp.eq.s32.totalorder %s20, 0
    %p220 = por %p218, %p219
    %p221 = scmp.le.s32.totalorder 1, %s14
    %p222 = scmp.lt.s32.totalorder %s14, 3
    %p223 = pnand %p221, %p222
    %p224 = pneg %p223
    // Predicated region
    $region9: #{conv2ds_forward_nchw.1} parent=5 // pred_check
      _
    $region10: #{conv2ds_forward_nchw.1} parent=5 // pred_check_branch
      %226 = sbr.rel (%p223) target = $region12
    $region11: #{conv2ds_forward_nchw.1} parent=5 // pred_region
      %s227 = ssub.s32 %s14, 1
      // Predicated region
      $region13: #{conv2ds_forward_nchw.1} parent=11 // pred_check
        %p228 = pneg %p61
      $region14: #{conv2ds_forward_nchw.1} parent=11 // pred_check_branch
        %230 = sbr.rel (%p228) target = $region16
      $region15: #{conv2ds_forward_nchw.1} parent=11 // pred_region
        _
      $region16: #{conv2ds_forward_nchw.1} parent=11 // pred_fallthru
        _
      // Predicated region
      $region17: #{conv2ds_forward_nchw.1} parent=11 // pred_check
        %p231 = pneg %p82
      $region18: #{conv2ds_forward_nchw.1} parent=11 // pred_check_branch
        %233 = sbr.rel (%p231) target = $region20
      $region19: #{conv2ds_forward_nchw.1} parent=11 // pred_region
        _
      $region20: #{conv2ds_forward_nchw.1} parent=11 // pred_fallthru
        _
      // Predicated region
      $region21: #{conv2ds_forward_nchw.1} parent=11 // pred_check
        %p234 = pneg %p103
      $region22: #{conv2ds_forward_nchw.1} parent=11 // pred_check_branch
        %236 = sbr.rel (%p234) target = $region24
      $region23: #{conv2ds_forward_nchw.1} parent=11 // pred_region
        _
      $region24: #{conv2ds_forward_nchw.1} parent=11 // pred_fallthru
        _
      // Predicated region
      $region25: #{conv2ds_forward_nchw.1} parent=11 // pred_check
        %p237 = pneg %p124
      $region26: #{conv2ds_forward_nchw.1} parent=11 // pred_check_branch
        %239 = sbr.rel (%p237) target = $region28
      $region27: #{conv2ds_forward_nchw.1} parent=11 // pred_region
        _
      $region28: #{conv2ds_forward_nchw.1} parent=11 // pred_fallthru
        _
      // Predicated region
      $region29: #{conv2ds_forward_nchw.1} parent=11 // pred_check
        %p240 = pneg %p145
      $region30: #{conv2ds_forward_nchw.1} parent=11 // pred_check_branch
        %242 = sbr.rel (%p240) target = $region32
      $region31: #{conv2ds_forward_nchw.1} parent=11 // pred_region
        _
      $region32: #{conv2ds_forward_nchw.1} parent=11 // pred_fallthru
        _
      // Predicated region
      $region33: #{conv2ds_forward_nchw.1} parent=11 // pred_check
        %p243 = pneg %p166
      $region34: #{conv2ds_forward_nchw.1} parent=11 // pred_check_branch
        %245 = sbr.rel (%p243) target = $region36
      $region35: #{conv2ds_forward_nchw.1} parent=11 // pred_region
        _
      $region36: #{conv2ds_forward_nchw.1} parent=11 // pred_fallthru
        _
      // Predicated region
      $region37: #{conv2ds_forward_nchw.1} parent=11 // pred_check
        %p246 = pneg %p187
      $region38: #{conv2ds_forward_nchw.1} parent=11 // pred_check_branch
        %248 = sbr.rel (%p246) target = $region40
      $region39: #{conv2ds_forward_nchw.1} parent=11 // pred_region
        _
      $region40: #{conv2ds_forward_nchw.1} parent=11 // pred_fallthru
        _
    $region12: #{conv2ds_forward_nchw.1} parent=5 // pred_fallthru
      _
    %p249 = scmp.lt.s32.totalorder %s14, 2
    // Predicated region
    $region41: #{conv2ds_forward_nchw.1} parent=5 // pred_check
      %p250 = pneg %p249
    $region42: #{conv2ds_forward_nchw.1} parent=5 // pred_check_branch
      %252 = sbr.rel (%p250) target = $region44
    $region43: #{conv2ds_forward_nchw.1} parent=5 // pred_region
      // Predicated region
      $region45: #{conv2ds_forward_nchw.1} parent=43 // pred_check
        %p253 = pneg %p34
      $region46: #{conv2ds_forward_nchw.1} parent=43 // pred_check_branch
        %255 = sbr.rel (%p253) target = $region48
      $region47: #{conv2ds_forward_nchw.1} parent=43 // pred_region
        %p256 = scmp.lt.s32.totalorder %s14, 1
        %s257 = scalar_select %p256, %s14, 1
        %s258 = smul.addr %s257, 2
        %s259 = smul.addr %s258, 4
        %s260 = scalar_lea.vmem %s0, %s259
      $region48: #{conv2ds_forward_nchw.1} parent=43 // pred_fallthru
        _
    $region44: #{conv2ds_forward_nchw.1} parent=5 // pred_fallthru
      _
    %p261 = scmp.le.s32.totalorder 1, %s14
    %p262 = scmp.lt.s32.totalorder %s14, 3
    %p263 = pnand %p261, %p262
    %p264 = pneg %p263
    // Predicated region
    $region49: #{conv2ds_forward_nchw.1} parent=5 // pred_check
      _
    $region50: #{conv2ds_forward_nchw.1} parent=5 // pred_check_branch
      %266 = sbr.rel (%p263) target = $region52
    $region51: #{conv2ds_forward_nchw.1} parent=5 // pred_region
      %s267 = ssub.s32 %s14, 1
      %p268 = scmp.lt.s32.totalorder %s19, 1
      %s269 = scalar_select %p268, %s19, 1
      %s270 = smul.addr %s269, 2
      %s271 = smul.addr %s270, 4
      %s272 = scalar_lea.vmem %s0, %s271
      %p273 = pneg %p40
      %p274 = pneg %p37
      %p275 = pneg %p61
      %p276 = pneg %p58
      %p277 = pneg %p82
      %p278 = pneg %p79
      %p279 = pneg %p103
      %p280 = pneg %p100
      %p281 = pneg %p124
      %p282 = pneg %p121
      %p283 = pneg %p145
      %p284 = pneg %p142
      %p285 = pneg %p166
      %p286 = pneg %p163
      %p287 = pneg %p187
      %p288 = pneg %p184
      %p289 = pneg %p213
      %p290 = pneg %p210
      %p291 = scmp.lt.s32.totalorder %s19, 1
      %s292 = scalar_select %p291, %s19, 1
      %s293 = smul.addr %s292, 2
      %s294 = smul.addr %s293, 4
      %s295 = scalar_lea.vmem %s8, %s294
      %p296 = scmp.lt.s32.totalorder %s19, 1
      %s297 = scalar_select %p296, %s19, 1
      %s298 = smul.addr %s297, 2
      %s299 = smul.addr %s298, 4
      %s300 = scalar_lea.vmem %s0, %s299
      %p301 = scmp.lt.s32.totalorder %s19, 1
      %s302 = scalar_select %p301, %s19, 1
      %s303 = smul.addr %s302, 2
      %s304 = smul.addr %s303, 4
      %s305 = scalar_lea.vmem %s8, %s304
      %306 = vst [vmem:[#allocation2] sm:$0xf0] 0.0
      %307 = vst [vmem:[#allocation2 + $0x8] sm:$0xf0] 0.0
      %v308 = vld [vmem:[%s300] sm:$0xff]
      %v310 = vcombine.high %v308, %v308
      %312 = vst [vmem:[#allocation2] sm:$0xf] %v308
      %313 = vst [vmem:[#allocation2 + $0x8] sm:$0xf] %v310
      %v314 = vld [vmem:[#allocation2] sm:$0xff]
      %v315 = vld [vmem:[#allocation2 + $0x8] sm:$0xff]
      %316 = vrot.lane.b32.xlu0 %v314, 17
      %v317 = vpop.permute.xlu0 %316
      %318 = vrot.lane.b32.xlu0 %v315, 17
      %v319 = vpop.permute.xlu0 %318
      %v320 = vlaneseq
      %v321 = vand.u32 %v320, 127
      %vm322 = vcmp.lt.s32.totalorder %v321, 17
      %v323 = vsel %vm322, %v317, %v319
      %v324 = vsel %vm322, %v319, %v317
      %v325 = vld [vmem:[%s1] ss:$8 sm:$0x3]
      %v327 = vlaneseq
      %v328 = vshrl.u32 %v327, 7
      %v329 = vsub.s32 0, %v328
      %v330 = vrot.slane %v325, %v329
      %v331 = vlaneseq
      %v332 = vshrl.u32 %v331, 7
      %v333 = vsub.s32 1, %v332
      %v334 = vrot.slane %v325, %v333
      %v337 = vmul.f32 %v324, %v330
      %v338 = vmul.f32 %v323, %v334
      %339 = vst [vmem:[#allocation3] sm:$0xff] %v337
      %340 = vst [vmem:[#allocation3 + $0x8] sm:$0xff] %v338
      %341 = vrot.lane.b32.xlu0 %v314, 16
      %v342 = vpop.permute.xlu0 %341
      %343 = vrot.lane.b32.xlu0 %v315, 16
      %v344 = vpop.permute.xlu0 %343
      %vm345 = vcmp.lt.s32.totalorder %v321, 16
      %v346 = vsel %vm345, %v342, %v344
      %v347 = vsel %vm345, %v344, %v342
      %s348 = scalar_lea.vmem %s1, 1
      %v349 = vld [vmem:[%s348] ss:$8 sm:$0x3]
      %v351 = vlaneseq
      %v352 = vshrl.u32 %v351, 7
      %v353 = vsub.s32 0, %v352
      %v354 = vrot.slane %v349, %v353
      %v355 = vlaneseq
      %v356 = vshrl.u32 %v355, 7
      %v357 = vsub.s32 1, %v356
      %v358 = vrot.slane %v349, %v357
      %v361 = vmul.f32 %v347, %v354
      %v362 = vmul.f32 %v346, %v358
      %363 = vst [vmem:[#allocation3 + $0x10] sm:$0xff] %v361
      %364 = vst [vmem:[#allocation3 + $0x18] sm:$0xff] %v362
      %365 = vrot.lane.b32.xlu0 %v314, 15
      %v366 = vpop.permute.xlu0 %365
      %367 = vrot.lane.b32.xlu0 %v315, 15
      %v368 = vpop.permute.xlu0 %367
      %vm369 = vcmp.lt.s32.totalorder %v321, 15
      %v370 = vsel %vm369, %v366, %v368
      %v371 = vsel %vm369, %v368, %v366
      %s372 = scalar_lea.vmem %s1, 2
      %v373 = vld [vmem:[%s372] ss:$8 sm:$0x3]
      %v375 = vlaneseq
      %v376 = vshrl.u32 %v375, 7
      %v377 = vsub.s32 0, %v376
      %v378 = vrot.slane %v373, %v377
      %v379 = vlaneseq
      %v380 = vshrl.u32 %v379, 7
      %v381 = vsub.s32 1, %v380
      %v382 = vrot.slane %v373, %v381
      %v385 = vmul.f32 %v371, %v378
      %v386 = vmul.f32 %v370, %v382
      %387 = vst [vmem:[#allocation3 + $0x20] sm:$0xff] %v385
      %388 = vst [vmem:[#allocation3 + $0x28] sm:$0xff] %v386
      %389 = vrot.lane.b32.xlu0 %v314, 1
      %v390 = vpop.permute.xlu0 %389
      %391 = vrot.lane.b32.xlu0 %v315, 1
      %v392 = vpop.permute.xlu0 %391
      %vm393 = vcmp.lt.s32.totalorder %v321, 1
      %v394 = vsel %vm393, %v390, %v392
      %v395 = vsel %vm393, %v392, %v390
      %s396 = scalar_lea.vmem %s1, 3
      %v397 = vld [vmem:[%s396] ss:$8 sm:$0x3]
      %v399 = vlaneseq
      %v400 = vshrl.u32 %v399, 7
      %v401 = vsub.s32 0, %v400
      %v402 = vrot.slane %v397, %v401
      %v403 = vlaneseq
      %v404 = vshrl.u32 %v403, 7
      %v405 = vsub.s32 1, %v404
      %v406 = vrot.slane %v397, %v405
      %v409 = vmul.f32 %v395, %v402
      %v410 = vmul.f32 %v394, %v406
      %411 = vst [vmem:[#allocation3 + $0x30] sm:$0xff] %v409
      %412 = vst [vmem:[#allocation3 + $0x38] sm:$0xff] %v410
      %s413 = scalar_lea.vmem %s1, 4
      %v414 = vld [vmem:[%s413] ss:$8 sm:$0x3]
      %v416 = vlaneseq
      %v417 = vshrl.u32 %v416, 7
      %v418 = vsub.s32 0, %v417
      %v419 = vrot.slane %v414, %v418
      %v420 = vlaneseq
      %v421 = vshrl.u32 %v420, 7
      %v422 = vsub.s32 1, %v421
      %v423 = vrot.slane %v414, %v422
      %v426 = vmul.f32 %v314, %v419
      %v427 = vmul.f32 %v315, %v423
      %428 = vst [vmem:[#allocation3 + $0x40] sm:$0xff] %v426
      %429 = vst [vmem:[#allocation3 + $0x48] sm:$0xff] %v427
      %430 = vrot.lane.b32.xlu0 %v314, 127
      %v431 = vpop.permute.xlu0 %430
      %432 = vrot.lane.b32.xlu0 %v315, 127
      %v433 = vpop.permute.xlu0 %432
      %vm434 = vcmp.lt.s32.totalorder %v321, 127
      %v435 = vsel %vm434, %v431, %v433
      %v436 = vsel %vm434, %v433, %v431
      %s437 = scalar_lea.vmem %s1, 5
      %v438 = vld [vmem:[%s437] ss:$8 sm:$0x3]
      %v440 = vlaneseq
      %v441 = vshrl.u32 %v440, 7
      %v442 = vsub.s32 0, %v441
      %v443 = vrot.slane %v438, %v442
      %v444 = vlaneseq
      %v445 = vshrl.u32 %v444, 7
      %v446 = vsub.s32 1, %v445
      %v447 = vrot.slane %v438, %v446
      %v450 = vmul.f32 %v435, %v443
      %v451 = vmul.f32 %v436, %v447
      %452 = vst [vmem:[#allocation3 + $0x50] sm:$0xff] %v450
      %453 = vst [vmem:[#allocation3 + $0x58] sm:$0xff] %v451
      %454 = vrot.lane.b32.xlu0 %v314, 113
      %v455 = vpop.permute.xlu0 %454
      %456 = vrot.lane.b32.xlu0 %v315, 113
      %v457 = vpop.permute.xlu0 %456
      %vm458 = vcmp.lt.s32.totalorder %v321, 113
      %v459 = vsel %vm458, %v455, %v457
      %v460 = vsel %vm458, %v457, %v455
      %s461 = scalar_lea.vmem %s1, 6
      %v462 = vld [vmem:[%s461] ss:$8 sm:$0x3]
      %v464 = vlaneseq
      %v465 = vshrl.u32 %v464, 7
      %v466 = vsub.s32 0, %v465
      %v467 = vrot.slane %v462, %v466
      %v468 = vlaneseq
      %v469 = vshrl.u32 %v468, 7
      %v470 = vsub.s32 1, %v469
      %v471 = vrot.slane %v462, %v470
      %v474 = vmul.f32 %v459, %v467
      %v475 = vmul.f32 %v460, %v471
      %476 = vst [vmem:[#allocation3 + $0x60] sm:$0xff] %v474
      %477 = vst [vmem:[#allocation3 + $0x68] sm:$0xff] %v475
      %478 = vrot.lane.b32.xlu0 %v314, 112
      %v479 = vpop.permute.xlu0 %478
      %480 = vrot.lane.b32.xlu0 %v315, 112
      %v481 = vpop.permute.xlu0 %480
      %vm482 = vcmp.lt.s32.totalorder %v321, 112
      %v483 = vsel %vm482, %v479, %v481
      %v484 = vsel %vm482, %v481, %v479
      %s485 = scalar_lea.vmem %s1, 7
      %v486 = vld [vmem:[%s485] ss:$8 sm:$0x3]
      %v488 = vlaneseq
      %v489 = vshrl.u32 %v488, 7
      %v490 = vsub.s32 0, %v489
      %v491 = vrot.slane %v486, %v490
      %v492 = vlaneseq
      %v493 = vshrl.u32 %v492, 7
      %v494 = vsub.s32 1, %v493
      %v495 = vrot.slane %v486, %v494
      %v498 = vmul.f32 %v483, %v491
      %v499 = vmul.f32 %v484, %v495
      %500 = vst [vmem:[#allocation3 + $0x70] sm:$0xff] %v498
      %501 = vst [vmem:[#allocation3 + $0x78] sm:$0xff] %v499
      %502 = vrot.lane.b32.xlu0 %v314, 111
      %v503 = vpop.permute.xlu0 %502
      %504 = vrot.lane.b32.xlu0 %v315, 111
      %v505 = vpop.permute.xlu0 %504
      %vm506 = vcmp.lt.s32.totalorder %v321, 111
      %v507 = vsel %vm506, %v503, %v505
      %v508 = vsel %vm506, %v505, %v503
      %s509 = scalar_lea.vmem %s1, 16
      %v510 = vld [vmem:[%s509] ss:$8 sm:$0x3]
      %v512 = vlaneseq
      %v513 = vshrl.u32 %v512, 7
      %v514 = vsub.s32 0, %v513
      %v515 = vrot.slane %v510, %v514
      %v516 = vlaneseq
      %v517 = vshrl.u32 %v516, 7
      %v518 = vsub.s32 1, %v517
      %v519 = vrot.slane %v510, %v518
      %v522 = vmul.f32 %v507, %v515
      %v523 = vmul.f32 %v508, %v519
      %524 = vst [vmem:[#allocation3 + $0x80] sm:$0xff] %v522
      %525 = vst [vmem:[#allocation3 + $0x88] sm:$0xff] %v523
      %v526 = vld [vmem:[%s2] sm:$0xff]
      %v527 = vld [vmem:[#allocation3] sm:$0xff]
      %v528 = vld [vmem:[#allocation3 + $0x8] sm:$0xff]
      %v529 = vld [vmem:[#allocation3 + $0x10] sm:$0xff]
      %v530 = vld [vmem:[#allocation3 + $0x18] sm:$0xff]
      %v531 = vld [vmem:[#allocation3 + $0x20] sm:$0xff]
      %v532 = vld [vmem:[#allocation3 + $0x28] sm:$0xff]
      %v533 = vld [vmem:[#allocation3 + $0x30] sm:$0xff]
      %v534 = vld [vmem:[#allocation3 + $0x38] sm:$0xff]
      %v535 = vld [vmem:[#allocation3 + $0x40] sm:$0xff]
      %v536 = vld [vmem:[#allocation3 + $0x48] sm:$0xff]
      %v537 = vld [vmem:[#allocation3 + $0x50] sm:$0xff]
      %v538 = vld [vmem:[#allocation3 + $0x58] sm:$0xff]
      %v539 = vld [vmem:[#allocation3 + $0x60] sm:$0xff]
      %v540 = vld [vmem:[#allocation3 + $0x68] sm:$0xff]
      %v541 = vld [vmem:[#allocation3 + $0x70] sm:$0xff]
      %v542 = vld [vmem:[#allocation3 + $0x78] sm:$0xff]
      %v543 = vld [vmem:[#allocation3 + $0x80] sm:$0xff]
      %v544 = vld [vmem:[#allocation3 + $0x88] sm:$0xff]
      %v545 = vld [vmem:[%s3] sm:$0xff]
      %547 = vset.pattern.permute.xlu0 0
      %548 = vperm.xlu0 %547, %v545
      %v549 = vpop.permute.xlu0 %548
      %vm551 = vcmask 588800
      %v553 = vsel %vm551, %v526, 0
      %555 = vmatprep.subr.mxu0 0.0
      %556 = vmatpush1.msra.mxu0 0.0
      %557 = vmatprep.subr.mxu0 0.0
      %558 = vmatpush1.msra.mxu0 0.0
      %559 = vmatprep.subr.mxu0 0.0
      %560 = vmatpush1.msra.mxu0 0.0
      %561 = vmatprep.subr.mxu0 0.0
      %562 = vmatpush1.msra.mxu0 0.0
      %563 = vmatprep.subr.mxu0 0.0
      %564 = vmatpush1.msra.mxu0 0.0
      %565 = vmatprep.subr.mxu0 0.0
      %566 = vmatpush1.msra.mxu0 0.0
      %567 = vmatprep.subr.mxu0 0.0
      %568 = vmatpush1.msra.mxu0 0.0
      %569 = vmatprep.subr.mxu0 %v544
      %570 = vmatpush1.msra.mxu0 %v543
      %571 = vmatprep.subr.mxu0 %v542
      %572 = vmatpush1.msra.mxu0 %v541
      %573 = vmatprep.subr.mxu0 %v540
      %574 = vmatpush1.msra.mxu0 %v539
      %575 = vmatprep.subr.mxu0 %v538
      %576 = vmatpush1.msra.mxu0 %v537
      %577 = vmatprep.subr.mxu0 %v536
      %578 = vmatpush1.msra.mxu0 %v535
      %579 = vmatprep.subr.mxu0 %v534
      %580 = vmatpush1.msra.mxu0 %v533
      %581 = vmatprep.subr.mxu0 %v532
      %582 = vmatpush1.msra.mxu0 %v531
      %583 = vmatprep.subr.mxu0 %v530
      %584 = vmatpush1.msra.mxu0 %v529
      %585 = vmatprep.subr.mxu0 %v528
      %586 = vmatpush1.msra.mxu0 %v527
      %587 = vmatprep.subr.mxu0 0.0
      %588 = vmatpush2.msra.mxu0 0.0
      %589 = vmatprep.subr.mxu0 0.0
      %590 = vmatpush2.msra.mxu0 0.0
      %591 = vmatprep.subr.mxu0 0.0
      %592 = vmatpush2.msra.mxu0 0.0
      %593 = vmatprep.subr.mxu0 0.0
      %594 = vmatpush2.msra.mxu0 0.0
      %595 = vmatprep.subr.mxu0 0.0
      %596 = vmatpush2.msra.mxu0 0.0
      %597 = vmatprep.subr.mxu0 0.0
      %598 = vmatpush2.msra.mxu0 0.0
      %599 = vmatprep.subr.mxu0 0.0
      %600 = vmatpush2.msra.mxu0 0.0
      %601 = vmatprep.subr.mxu0 0.0
      %602 = vmatpush2.msra.mxu0 0.0
      %603 = vmatprep.subr.mxu0 0.0
      %604 = vmatpush2.msra.mxu0 0.0
      %605 = vmatprep.subr.mxu0 0.0
      %606 = vmatpush2.msra.mxu0 0.0
      %607 = vmatprep.subr.mxu0 0.0
      %608 = vmatpush2.msra.mxu0 0.0
      %609 = vmatprep.subr.mxu0 0.0
      %610 = vmatpush2.msra.mxu0 0.0
      %611 = vmatprep.subr.mxu0 0.0
      %612 = vmatpush2.msra.mxu0 0.0
      %613 = vmatprep.subr.mxu0 0.0
      %614 = vmatpush2.msra.mxu0 0.0
      %615 = vmatprep.subr.mxu0 0.0
      %616 = vmatpush2.msra.mxu0 0.0
      %617 = vmatprep.subr.mxu0 0.0
      %618 = vmatpush2.msra.mxu0 0.0
      %619 = vmatprep.mubr.f32.mxu0 0.0
      %620 = vmatmul.mubr.f32.gmra.mxu0 %v553
      %v621 = vpop.f32.mrf.mxu0
      %v622 = vadd.f32 %v549, %v621
      %v623 = vpop.f32.mrf.mxu0
      %v624 = vadd.f32 %v549, %v623
      %625 = vdwg.mxu0
      %v626 = vmax.f32 %v622, 0.0
      %v627 = vmax.f32 %v624, 0.0
      %628 = vst [vmem:[#allocation2] sm:$0xff] %v626
      %629 = vst [vmem:[#allocation2 + $0x8] sm:$0xff] %v627
      %v630 = vld [vmem:[#allocation2] sm:$0xff]
      %v631 = vld [vmem:[#allocation2 + $0x8] sm:$0xff]
      %632 = vrot.lane.b32.xlu0 %v630, 17
      %v633 = vpop.permute.xlu0 %632
      %634 = vrot.lane.b32.xlu0 %v631, 17
      %v635 = vpop.permute.xlu0 %634
      %v636 = vsel %vm322, %v633, %v635
      %v637 = vsel %vm322, %v635, %v633
      %v638 = vld [vmem:[%s1] ss:$8 sm:$0x3]
      %v640 = vlaneseq
      %v641 = vshrl.u32 %v640, 7
      %v642 = vsub.s32 0, %v641
      %v643 = vrot.slane %v638, %v642
      %v644 = vlaneseq
      %v645 = vshrl.u32 %v644, 7
      %v646 = vsub.s32 1, %v645
      %v647 = vrot.slane %v638, %v646
      %v650 = vmul.f32 %v637, %v643
      %v651 = vmul.f32 %v636, %v647
      %652 = vst [vmem:[#allocation3] sm:$0xff] %v650
      %653 = vst [vmem:[#allocation3 + $0x8] sm:$0xff] %v651
      %654 = vrot.lane.b32.xlu0 %v630, 16
      %v655 = vpop.permute.xlu0 %654
      %656 = vrot.lane.b32.xlu0 %v631, 16
      %v657 = vpop.permute.xlu0 %656
      %v658 = vsel %vm345, %v655, %v657
      %v659 = vsel %vm345, %v657, %v655
      %v660 = vld [vmem:[%s348] ss:$8 sm:$0x3]
      %v662 = vlaneseq
      %v663 = vshrl.u32 %v662, 7
      %v664 = vsub.s32 0, %v663
      %v665 = vrot.slane %v660, %v664
      %v666 = vlaneseq
      %v667 = vshrl.u32 %v666, 7
      %v668 = vsub.s32 1, %v667
      %v669 = vrot.slane %v660, %v668
      %v672 = vmul.f32 %v659, %v665
      %v673 = vmul.f32 %v658, %v669
      %674 = vst [vmem:[#allocation3 + $0x10] sm:$0xff] %v672
      %675 = vst [vmem:[#allocation3 + $0x18] sm:$0xff] %v673
      %676 = vrot.lane.b32.xlu0 %v630, 15
      %v677 = vpop.permute.xlu0 %676
      %678 = vrot.lane.b32.xlu0 %v631, 15
      %v679 = vpop.permute.xlu0 %678
      %v680 = vsel %vm369, %v677, %v679
      %v681 = vsel %vm369, %v679, %v677
      %v682 = vld [vmem:[%s372] ss:$8 sm:$0x3]
      %v684 = vlaneseq
      %v685 = vshrl.u32 %v684, 7
      %v686 = vsub.s32 0, %v685
      %v687 = vrot.slane %v682, %v686
      %v688 = vlaneseq
      %v689 = vshrl.u32 %v688, 7
      %v690 = vsub.s32 1, %v689
      %v691 = vrot.slane %v682, %v690
      %v694 = vmul.f32 %v681, %v687
      %v695 = vmul.f32 %v680, %v691
      %696 = vst [vmem:[#allocation3 + $0x20] sm:$0xff] %v694
      %697 = vst [vmem:[#allocation3 + $0x28] sm:$0xff] %v695
      %698 = vrot.lane.b32.xlu0 %v630, 1
      %v699 = vpop.permute.xlu0 %698
      %700 = vrot.lane.b32.xlu0 %v631, 1
      %v701 = vpop.permute.xlu0 %700
      %v702 = vsel %vm393, %v699, %v701
      %v703 = vsel %vm393, %v701, %v699
      %v704 = vld [vmem:[%s396] ss:$8 sm:$0x3]
      %v706 = vlaneseq
      %v707 = vshrl.u32 %v706, 7
      %v708 = vsub.s32 0, %v707
      %v709 = vrot.slane %v704, %v708
      %v710 = vlaneseq
      %v711 = vshrl.u32 %v710, 7
      %v712 = vsub.s32 1, %v711
      %v713 = vrot.slane %v704, %v712
      %v716 = vmul.f32 %v703, %v709
      %v717 = vmul.f32 %v702, %v713
      %718 = vst [vmem:[#allocation3 + $0x30] sm:$0xff] %v716
      %719 = vst [vmem:[#allocation3 + $0x38] sm:$0xff] %v717
      %v720 = vld [vmem:[%s413] ss:$8 sm:$0x3]
      %v722 = vlaneseq
      %v723 = vshrl.u32 %v722, 7
      %v724 = vsub.s32 0, %v723
      %v725 = vrot.slane %v720, %v724
      %v726 = vlaneseq
      %v727 = vshrl.u32 %v726, 7
      %v728 = vsub.s32 1, %v727
      %v729 = vrot.slane %v720, %v728
      %v732 = vmul.f32 %v630, %v725
      %v733 = vmul.f32 %v631, %v729
      %734 = vst [vmem:[#allocation3 + $0x40] sm:$0xff] %v732
      %735 = vst [vmem:[#allocation3 + $0x48] sm:$0xff] %v733
      %736 = vrot.lane.b32.xlu0 %v630, 127
      %v737 = vpop.permute.xlu0 %736
      %738 = vrot.lane.b32.xlu0 %v631, 127
      %v739 = vpop.permute.xlu0 %738
      %v740 = vsel %vm434, %v737, %v739
      %v741 = vsel %vm434, %v739, %v737
      %v742 = vld [vmem:[%s437] ss:$8 sm:$0x3]
      %v744 = vlaneseq
      %v745 = vshrl.u32 %v744, 7
      %v746 = vsub.s32 0, %v745
      %v747 = vrot.slane %v742, %v746
      %v748 = vlaneseq
      %v749 = vshrl.u32 %v748, 7
      %v750 = vsub.s32 1, %v749
      %v751 = vrot.slane %v742, %v750
      %v754 = vmul.f32 %v740, %v747
      %v755 = vmul.f32 %v741, %v751
      %756 = vst [vmem:[#allocation3 + $0x50] sm:$0xff] %v754
      %757 = vst [vmem:[#allocation3 + $0x58] sm:$0xff] %v755
      %758 = vrot.lane.b32.xlu0 %v630, 113
      %v759 = vpop.permute.xlu0 %758
      %760 = vrot.lane.b32.xlu0 %v631, 113
      %v761 = vpop.permute.xlu0 %760
      %v762 = vsel %vm458, %v759, %v761
      %v763 = vsel %vm458, %v761, %v759
      %v764 = vld [vmem:[%s461] ss:$8 sm:$0x3]
      %v766 = vlaneseq
      %v767 = vshrl.u32 %v766, 7
      %v768 = vsub.s32 0, %v767
      %v769 = vrot.slane %v764, %v768
      %v770 = vlaneseq
      %v771 = vshrl.u32 %v770, 7
      %v772 = vsub.s32 1, %v771
      %v773 = vrot.slane %v764, %v772
      %v776 = vmul.f32 %v762, %v769
      %v777 = vmul.f32 %v763, %v773
      %778 = vst [vmem:[#allocation3 + $0x60] sm:$0xff] %v776
      %779 = vst [vmem:[#allocation3 + $0x68] sm:$0xff] %v777
      %780 = vrot.lane.b32.xlu0 %v630, 112
      %v781 = vpop.permute.xlu0 %780
      %782 = vrot.lane.b32.xlu0 %v631, 112
      %v783 = vpop.permute.xlu0 %782
      %v784 = vsel %vm482, %v781, %v783
      %v785 = vsel %vm482, %v783, %v781
      %v786 = vld [vmem:[%s485] ss:$8 sm:$0x3]
      %v788 = vlaneseq
      %v789 = vshrl.u32 %v788, 7
      %v790 = vsub.s32 0, %v789
      %v791 = vrot.slane %v786, %v790
      %v792 = vlaneseq
      %v793 = vshrl.u32 %v792, 7
      %v794 = vsub.s32 1, %v793
      %v795 = vrot.slane %v786, %v794
      %v798 = vmul.f32 %v784, %v791
      %v799 = vmul.f32 %v785, %v795
      %800 = vst [vmem:[#allocation3 + $0x70] sm:$0xff] %v798
      %801 = vst [vmem:[#allocation3 + $0x78] sm:$0xff] %v799
      %802 = vrot.lane.b32.xlu0 %v630, 111
      %v803 = vpop.permute.xlu0 %802
      %804 = vrot.lane.b32.xlu0 %v631, 111
      %v805 = vpop.permute.xlu0 %804
      %v806 = vsel %vm506, %v803, %v805
      %v807 = vsel %vm506, %v805, %v803
      %v808 = vld [vmem:[%s509] ss:$8 sm:$0x3]
      %v810 = vlaneseq
      %v811 = vshrl.u32 %v810, 7
      %v812 = vsub.s32 0, %v811
      %v813 = vrot.slane %v808, %v812
      %v814 = vlaneseq
      %v815 = vshrl.u32 %v814, 7
      %v816 = vsub.s32 1, %v815
      %v817 = vrot.slane %v808, %v816
      %v820 = vmul.f32 %v806, %v813
      %v821 = vmul.f32 %v807, %v817
      %822 = vst [vmem:[#allocation3 + $0x80] sm:$0xff] %v820
      %823 = vst [vmem:[#allocation3 + $0x88] sm:$0xff] %v821
      %v824 = vld [vmem:[%s4] sm:$0xff]
      %v825 = vld [vmem:[#allocation3] sm:$0xff]
      %v826 = vld [vmem:[#allocation3 + $0x8] sm:$0xff]
      %v827 = vld [vmem:[#allocation3 + $0x10] sm:$0xff]
      %v828 = vld [vmem:[#allocation3 + $0x18] sm:$0xff]
      %v829 = vld [vmem:[#allocation3 + $0x20] sm:$0xff]
      %v830 = vld [vmem:[#allocation3 + $0x28] sm:$0xff]
      %v831 = vld [vmem:[#allocation3 + $0x30] sm:$0xff]
      %v832 = vld [vmem:[#allocation3 + $0x38] sm:$0xff]
      %v833 = vld [vmem:[#allocation3 + $0x40] sm:$0xff]
      %v834 = vld [vmem:[#allocation3 + $0x48] sm:$0xff]
      %v835 = vld [vmem:[#allocation3 + $0x50] sm:$0xff]
      %v836 = vld [vmem:[#allocation3 + $0x58] sm:$0xff]
      %v837 = vld [vmem:[#allocation3 + $0x60] sm:$0xff]
      %v838 = vld [vmem:[#allocation3 + $0x68] sm:$0xff]
      %v839 = vld [vmem:[#allocation3 + $0x70] sm:$0xff]
      %v840 = vld [vmem:[#allocation3 + $0x78] sm:$0xff]
      %v841 = vld [vmem:[#allocation3 + $0x80] sm:$0xff]
      %v842 = vld [vmem:[#allocation3 + $0x88] sm:$0xff]
      %v843 = vld [vmem:[%s5] sm:$0xff]
      %845 = vset.pattern.permute.xlu0 0
      %846 = vperm.xlu0 %845, %v843
      %v847 = vpop.permute.xlu0 %846
      %v850 = vsel %vm551, %v824, 0
      %852 = vmatprep.subr.mxu0 0.0
      %853 = vmatpush1.msra.mxu0 0.0
      %854 = vmatprep.subr.mxu0 0.0
      %855 = vmatpush1.msra.mxu0 0.0
      %856 = vmatprep.subr.mxu0 0.0
      %857 = vmatpush1.msra.mxu0 0.0
      %858 = vmatprep.subr.mxu0 0.0
      %859 = vmatpush1.msra.mxu0 0.0
      %860 = vmatprep.subr.mxu0 0.0
      %861 = vmatpush1.msra.mxu0 0.0
      %862 = vmatprep.subr.mxu0 0.0
      %863 = vmatpush1.msra.mxu0 0.0
      %864 = vmatprep.subr.mxu0 0.0
      %865 = vmatpush1.msra.mxu0 0.0
      %866 = vmatprep.subr.mxu0 %v842
      %867 = vmatpush1.msra.mxu0 %v841
      %868 = vmatprep.subr.mxu0 %v840
      %869 = vmatpush1.msra.mxu0 %v839
      %870 = vmatprep.subr.mxu0 %v838
      %871 = vmatpush1.msra.mxu0 %v837
      %872 = vmatprep.subr.mxu0 %v836
      %873 = vmatpush1.msra.mxu0 %v835
      %874 = vmatprep.subr.mxu0 %v834
      %875 = vmatpush1.msra.mxu0 %v833
      %876 = vmatprep.subr.mxu0 %v832
      %877 = vmatpush1.msra.mxu0 %v831
      %878 = vmatprep.subr.mxu0 %v830
      %879 = vmatpush1.msra.mxu0 %v829
      %880 = vmatprep.subr.mxu0 %v828
      %881 = vmatpush1.msra.mxu0 %v827
      %882 = vmatprep.subr.mxu0 %v826
      %883 = vmatpush1.msra.mxu0 %v825
      %884 = vmatprep.subr.mxu0 0.0
      %885 = vmatpush2.msra.mxu0 0.0
      %886 = vmatprep.subr.mxu0 0.0
      %887 = vmatpush2.msra.mxu0 0.0
      %888 = vmatprep.subr.mxu0 0.0
      %889 = vmatpush2.msra.mxu0 0.0
      %890 = vmatprep.subr.mxu0 0.0
      %891 = vmatpush2.msra.mxu0 0.0
      %892 = vmatprep.subr.mxu0 0.0
      %893 = vmatpush2.msra.mxu0 0.0
      %894 = vmatprep.subr.mxu0 0.0
      %895 = vmatpush2.msra.mxu0 0.0
      %896 = vmatprep.subr.mxu0 0.0
      %897 = vmatpush2.msra.mxu0 0.0
      %898 = vmatprep.subr.mxu0 0.0
      %899 = vmatpush2.msra.mxu0 0.0
      %900 = vmatprep.subr.mxu0 0.0
      %901 = vmatpush2.msra.mxu0 0.0
      %902 = vmatprep.subr.mxu0 0.0
      %903 = vmatpush2.msra.mxu0 0.0
      %904 = vmatprep.subr.mxu0 0.0
      %905 = vmatpush2.msra.mxu0 0.0
      %906 = vmatprep.subr.mxu0 0.0
      %907 = vmatpush2.msra.mxu0 0.0
      %908 = vmatprep.subr.mxu0 0.0
      %909 = vmatpush2.msra.mxu0 0.0
      %910 = vmatprep.subr.mxu0 0.0
      %911 = vmatpush2.msra.mxu0 0.0
      %912 = vmatprep.subr.mxu0 0.0
      %913 = vmatpush2.msra.mxu0 0.0
      %914 = vmatprep.subr.mxu0 0.0
      %915 = vmatpush2.msra.mxu0 0.0
      %916 = vmatprep.mubr.f32.mxu0 0.0
      %917 = vmatmul.mubr.f32.gmra.mxu0 %v850
      %v918 = vpop.f32.mrf.mxu0
      %v919 = vadd.f32 %v847, %v918
      %v920 = vpop.f32.mrf.mxu0
      %v921 = vadd.f32 %v847, %v920
      %922 = vdwg.mxu0
      %v923 = vmax.f32 %v919, 0.0
      %v924 = vmax.f32 %v921, 0.0
      %925 = vst [vmem:[#allocation2] sm:$0xff] %v923
      %926 = vst [vmem:[#allocation2 + $0x8] sm:$0xff] %v924
      %v927 = vld [vmem:[#allocation2] sm:$0xff]
      %v928 = vld [vmem:[#allocation2 + $0x8] sm:$0xff]
      %929 = vrot.lane.b32.xlu0 %v927, 17
      %v930 = vpop.permute.xlu0 %929
      %931 = vrot.lane.b32.xlu0 %v928, 17
      %v932 = vpop.permute.xlu0 %931
      %v933 = vsel %vm322, %v930, %v932
      %v934 = vsel %vm322, %v932, %v930
      %v935 = vld [vmem:[%s1] ss:$8 sm:$0x3]
      %v937 = vlaneseq
      %v938 = vshrl.u32 %v937, 7
      %v939 = vsub.s32 0, %v938
      %v940 = vrot.slane %v935, %v939
      %v941 = vlaneseq
      %v942 = vshrl.u32 %v941, 7
      %v943 = vsub.s32 1, %v942
      %v944 = vrot.slane %v935, %v943
      %v947 = vmul.f32 %v934, %v940
      %v948 = vmul.f32 %v933, %v944
      %949 = vst [vmem:[#allocation3] sm:$0xff] %v947
      %950 = vst [vmem:[#allocation3 + $0x8] sm:$0xff] %v948
      %951 = vrot.lane.b32.xlu0 %v927, 16
      %v952 = vpop.permute.xlu0 %951
      %953 = vrot.lane.b32.xlu0 %v928, 16
      %v954 = vpop.permute.xlu0 %953
      %v955 = vsel %vm345, %v952, %v954
      %v956 = vsel %vm345, %v954, %v952
      %v957 = vld [vmem:[%s348] ss:$8 sm:$0x3]
      %v959 = vlaneseq
      %v960 = vshrl.u32 %v959, 7
      %v961 = vsub.s32 0, %v960
      %v962 = vrot.slane %v957, %v961
      %v963 = vlaneseq
      %v964 = vshrl.u32 %v963, 7
      %v965 = vsub.s32 1, %v964
      %v966 = vrot.slane %v957, %v965
      %v969 = vmul.f32 %v956, %v962
      %v970 = vmul.f32 %v955, %v966
      %971 = vst [vmem:[#allocation3 + $0x10] sm:$0xff] %v969
      %972 = vst [vmem:[#allocation3 + $0x18] sm:$0xff] %v970
      %973 = vrot.lane.b32.xlu0 %v927, 15
      %v974 = vpop.permute.xlu0 %973
      %975 = vrot.lane.b32.xlu0 %v928, 15
      %v976 = vpop.permute.xlu0 %975
      %v977 = vsel %vm369, %v974, %v976
      %v978 = vsel %vm369, %v976, %v974
      %v979 = vld [vmem:[%s372] ss:$8 sm:$0x3]
      %v981 = vlaneseq
      %v982 = vshrl.u32 %v981, 7
      %v983 = vsub.s32 0, %v982
      %v984 = vrot.slane %v979, %v983
      %v985 = vlaneseq
      %v986 = vshrl.u32 %v985, 7
      %v987 = vsub.s32 1, %v986
      %v988 = vrot.slane %v979, %v987
      %v991 = vmul.f32 %v978, %v984
      %v992 = vmul.f32 %v977, %v988
      %993 = vst [vmem:[#allocation3 + $0x20] sm:$0xff] %v991
      %994 = vst [vmem:[#allocation3 + $0x28] sm:$0xff] %v992
      %995 = vrot.lane.b32.xlu0 %v927, 1
      %v996 = vpop.permute.xlu0 %995
      %997 = vrot.lane.b32.xlu0 %v928, 1
      %v998 = vpop.permute.xlu0 %997
      %v999 = vsel %vm393, %v996, %v998
      %v1000 = vsel %vm393, %v998, %v996
      %v1001 = vld [vmem:[%s396] ss:$8 sm:$0x3]
      %v1003 = vlaneseq
      %v1004 = vshrl.u32 %v1003, 7
      %v1005 = vsub.s32 0, %v1004
      %v1006 = vrot.slane %v1001, %v1005
      %v1007 = vlaneseq
      %v1008 = vshrl.u32 %v1007, 7
      %v1009 = vsub.s32 1, %v1008
      %v1010 = vrot.slane %v1001, %v1009
      %v1013 = vmul.f32 %v1000, %v1006
      %v1014 = vmul.f32 %v999, %v1010
      %1015 = vst [vmem:[#allocation3 + $0x30] sm:$0xff] %v1013
      %1016 = vst [vmem:[#allocation3 + $0x38] sm:$0xff] %v1014
      %v1017 = vld [vmem:[%s413] ss:$8 sm:$0x3]
      %v1019 = vlaneseq
      %v1020 = vshrl.u32 %v1019, 7
      %v1021 = vsub.s32 0, %v1020
      %v1022 = vrot.slane %v1017, %v1021
      %v1023 = vlaneseq
      %v1024 = vshrl.u32 %v1023, 7
      %v1025 = vsub.s32 1, %v1024
      %v1026 = vrot.slane %v1017, %v1025
      %v1029 = vmul.f32 %v927, %v1022
      %v1030 = vmul.f32 %v928, %v1026
      %1031 = vst [vmem:[#allocation3 + $0x40] sm:$0xff] %v1029
      %1032 = vst [vmem:[#allocation3 + $0x48] sm:$0xff] %v1030
      %1033 = vrot.lane.b32.xlu0 %v927, 127
      %v1034 = vpop.permute.xlu0 %1033
      %1035 = vrot.lane.b32.xlu0 %v928, 127
      %v1036 = vpop.permute.xlu0 %1035
      %v1037 = vsel %vm434, %v1034, %v1036
      %v1038 = vsel %vm434, %v1036, %v1034
      %v1039 = vld [vmem:[%s437] ss:$8 sm:$0x3]
      %v1041 = vlaneseq
      %v1042 = vshrl.u32 %v1041, 7
      %v1043 = vsub.s32 0, %v1042
      %v1044 = vrot.slane %v1039, %v1043
      %v1045 = vlaneseq
      %v1046 = vshrl.u32 %v1045, 7
      %v1047 = vsub.s32 1, %v1046
      %v1048 = vrot.slane %v1039, %v1047
      %v1051 = vmul.f32 %v1037, %v1044
      %v1052 = vmul.f32 %v1038, %v1048
      %1053 = vst [vmem:[#allocation3 + $0x50] sm:$0xff] %v1051
      %1054 = vst [vmem:[#allocation3 + $0x58] sm:$0xff] %v1052
      %1055 = vrot.lane.b32.xlu0 %v927, 113
      %v1056 = vpop.permute.xlu0 %1055
      %1057 = vrot.lane.b32.xlu0 %v928, 113
      %v1058 = vpop.permute.xlu0 %1057
      %v1059 = vsel %vm458, %v1056, %v1058
      %v1060 = vsel %vm458, %v1058, %v1056
      %v1061 = vld [vmem:[%s461] ss:$8 sm:$0x3]
      %v1063 = vlaneseq
      %v1064 = vshrl.u32 %v1063, 7
      %v1065 = vsub.s32 0, %v1064
      %v1066 = vrot.slane %v1061, %v1065
      %v1067 = vlaneseq
      %v1068 = vshrl.u32 %v1067, 7
      %v1069 = vsub.s32 1, %v1068
      %v1070 = vrot.slane %v1061, %v1069
      %v1073 = vmul.f32 %v1059, %v1066
      %v1074 = vmul.f32 %v1060, %v1070
      %1075 = vst [vmem:[#allocation3 + $0x60] sm:$0xff] %v1073
      %1076 = vst [vmem:[#allocation3 + $0x68] sm:$0xff] %v1074
      %1077 = vrot.lane.b32.xlu0 %v927, 112
      %v1078 = vpop.permute.xlu0 %1077
      %1079 = vrot.lane.b32.xlu0 %v928, 112
      %v1080 = vpop.permute.xlu0 %1079
      %v1081 = vsel %vm482, %v1078, %v1080
      %v1082 = vsel %vm482, %v1080, %v1078
      %v1083 = vld [vmem:[%s485] ss:$8 sm:$0x3]
      %v1085 = vlaneseq
      %v1086 = vshrl.u32 %v1085, 7
      %v1087 = vsub.s32 0, %v1086
      %v1088 = vrot.slane %v1083, %v1087
      %v1089 = vlaneseq
      %v1090 = vshrl.u32 %v1089, 7
      %v1091 = vsub.s32 1, %v1090
      %v1092 = vrot.slane %v1083, %v1091
      %v1095 = vmul.f32 %v1081, %v1088
      %v1096 = vmul.f32 %v1082, %v1092
      %1097 = vst [vmem:[#allocation3 + $0x70] sm:$0xff] %v1095
      %1098 = vst [vmem:[#allocation3 + $0x78] sm:$0xff] %v1096
      %1099 = vrot.lane.b32.xlu0 %v927, 111
      %v1100 = vpop.permute.xlu0 %1099
      %1101 = vrot.lane.b32.xlu0 %v928, 111
      %v1102 = vpop.permute.xlu0 %1101
      %v1103 = vsel %vm506, %v1100, %v1102
      %v1104 = vsel %vm506, %v1102, %v1100
      %v1105 = vld [vmem:[%s509] ss:$8 sm:$0x3]
      %v1107 = vlaneseq
      %v1108 = vshrl.u32 %v1107, 7
      %v1109 = vsub.s32 0, %v1108
      %v1110 = vrot.slane %v1105, %v1109
      %v1111 = vlaneseq
      %v1112 = vshrl.u32 %v1111, 7
      %v1113 = vsub.s32 1, %v1112
      %v1114 = vrot.slane %v1105, %v1113
      %v1117 = vmul.f32 %v1103, %v1110
      %v1118 = vmul.f32 %v1104, %v1114
      %1119 = vst [vmem:[#allocation3 + $0x80] sm:$0xff] %v1117
      %1120 = vst [vmem:[#allocation3 + $0x88] sm:$0xff] %v1118
      %v1121 = vld [vmem:[%s6] sm:$0xf]
      %v1122 = vld [vmem:[#allocation3] sm:$0xff]
      %v1123 = vld [vmem:[#allocation3 + $0x8] sm:$0xff]
      %v1124 = vld [vmem:[#allocation3 + $0x10] sm:$0xff]
      %v1125 = vld [vmem:[#allocation3 + $0x18] sm:$0xff]
      %v1126 = vld [vmem:[#allocation3 + $0x20] sm:$0xff]
      %v1127 = vld [vmem:[#allocation3 + $0x28] sm:$0xff]
      %v1128 = vld [vmem:[#allocation3 + $0x30] sm:$0xff]
      %v1129 = vld [vmem:[#allocation3 + $0x38] sm:$0xff]
      %v1130 = vld [vmem:[#allocation3 + $0x40] sm:$0xff]
      %v1131 = vld [vmem:[#allocation3 + $0x48] sm:$0xff]
      %v1132 = vld [vmem:[#allocation3 + $0x50] sm:$0xff]
      %v1133 = vld [vmem:[#allocation3 + $0x58] sm:$0xff]
      %v1134 = vld [vmem:[#allocation3 + $0x60] sm:$0xff]
      %v1135 = vld [vmem:[#allocation3 + $0x68] sm:$0xff]
      %v1136 = vld [vmem:[#allocation3 + $0x70] sm:$0xff]
      %v1137 = vld [vmem:[#allocation3 + $0x78] sm:$0xff]
      %v1138 = vld [vmem:[#allocation3 + $0x80] sm:$0xff]
      %v1139 = vld [vmem:[#allocation3 + $0x88] sm:$0xff]
      %v1140 = vld [vmem:[%s7] sm:$0xf]
      %1142 = vset.pattern.permute.xlu0 0
      %1143 = vperm.xlu0 %1142, %v1140
      %v1144 = vpop.permute.xlu0 %1143
      %v1147 = vsel %vm551, %v1121, 0
      %1149 = vmatprep.subr.mxu0 0.0
      %1150 = vmatpush1.msra.mxu0 0.0
      %1151 = vmatprep.subr.mxu0 0.0
      %1152 = vmatpush1.msra.mxu0 0.0
      %1153 = vmatprep.subr.mxu0 0.0
      %1154 = vmatpush1.msra.mxu0 0.0
      %1155 = vmatprep.subr.mxu0 0.0
      %1156 = vmatpush1.msra.mxu0 0.0
      %1157 = vmatprep.subr.mxu0 0.0
      %1158 = vmatpush1.msra.mxu0 0.0
      %1159 = vmatprep.subr.mxu0 0.0
      %1160 = vmatpush1.msra.mxu0 0.0
      %1161 = vmatprep.subr.mxu0 0.0
      %1162 = vmatpush1.msra.mxu0 0.0
      %1163 = vmatprep.subr.mxu0 %v1139
      %1164 = vmatpush1.msra.mxu0 %v1138
      %1165 = vmatprep.subr.mxu0 %v1137
      %1166 = vmatpush1.msra.mxu0 %v1136
      %1167 = vmatprep.subr.mxu0 %v1135
      %1168 = vmatpush1.msra.mxu0 %v1134
      %1169 = vmatprep.subr.mxu0 %v1133
      %1170 = vmatpush1.msra.mxu0 %v1132
      %1171 = vmatprep.subr.mxu0 %v1131
      %1172 = vmatpush1.msra.mxu0 %v1130
      %1173 = vmatprep.subr.mxu0 %v1129
      %1174 = vmatpush1.msra.mxu0 %v1128
      %1175 = vmatprep.subr.mxu0 %v1127
      %1176 = vmatpush1.msra.mxu0 %v1126
      %1177 = vmatprep.subr.mxu0 %v1125
      %1178 = vmatpush1.msra.mxu0 %v1124
      %1179 = vmatprep.subr.mxu0 %v1123
      %1180 = vmatpush1.msra.mxu0 %v1122
      %1181 = vmatprep.subr.mxu0 0.0
      %1182 = vmatpush2.msra.mxu0 0.0
      %1183 = vmatprep.subr.mxu0 0.0
      %1184 = vmatpush2.msra.mxu0 0.0
      %1185 = vmatprep.subr.mxu0 0.0
      %1186 = vmatpush2.msra.mxu0 0.0
      %1187 = vmatprep.subr.mxu0 0.0
      %1188 = vmatpush2.msra.mxu0 0.0
      %1189 = vmatprep.subr.mxu0 0.0
      %1190 = vmatpush2.msra.mxu0 0.0
      %1191 = vmatprep.subr.mxu0 0.0
      %1192 = vmatpush2.msra.mxu0 0.0
      %1193 = vmatprep.subr.mxu0 0.0
      %1194 = vmatpush2.msra.mxu0 0.0
      %1195 = vmatprep.subr.mxu0 0.0
      %1196 = vmatpush2.msra.mxu0 0.0
      %1197 = vmatprep.subr.mxu0 0.0
      %1198 = vmatpush2.msra.mxu0 0.0
      %1199 = vmatprep.subr.mxu0 0.0
      %1200 = vmatpush2.msra.mxu0 0.0
      %1201 = vmatprep.subr.mxu0 0.0
      %1202 = vmatpush2.msra.mxu0 0.0
      %1203 = vmatprep.subr.mxu0 0.0
      %1204 = vmatpush2.msra.mxu0 0.0
      %1205 = vmatprep.subr.mxu0 0.0
      %1206 = vmatpush2.msra.mxu0 0.0
      %1207 = vmatprep.subr.mxu0 0.0
      %1208 = vmatpush2.msra.mxu0 0.0
      %1209 = vmatprep.subr.mxu0 0.0
      %1210 = vmatpush2.msra.mxu0 0.0
      %1211 = vmatprep.subr.mxu0 0.0
      %1212 = vmatpush2.msra.mxu0 0.0
      %1213 = vmatprep.mubr.f32.mxu0 0.0
      %1214 = vmatmul.mubr.f32.gmra.mxu0 %v1147
      %v1215 = vpop.f32.mrf.mxu0
      %v1216 = vadd.f32 %v1144, %v1215
      %v1217 = vpop.f32.mrf.mxu0
      %v1218 = vadd.f32 %v1144, %v1217
      %1219 = vdwg.mxu0
      %v1220 = vmax.f32 %v1216, 0.0
      %v1221 = vmax.f32 %v1218, 0.0
      %v1224 = vcombine.low %v1220, %v1221
      %1226 = vst [vmem:[%s305] sm:$0xff] %v1224
      %p1227 = scmp.lt.s32.totalorder %s19, 1
      %s1228 = scalar_select %p1227, %s19, 1
      %s1229 = smul.addr %s1228, 2
      %s1230 = smul.addr %s1229, 4
      %s1231 = scalar_lea.vmem %s8, %s1230
      // Predicated region
      $region53: #{conv2ds_forward_nchw.1} parent=51 // pred_check
        %p1232 = pneg %p210
      $region54: #{conv2ds_forward_nchw.1} parent=51 // pred_check_branch
        %1234 = sbr.rel (%p1232) target = $region56
      $region55: #{conv2ds_forward_nchw.1} parent=51 // pred_region
        _
      $region56: #{conv2ds_forward_nchw.1} parent=51 // pred_fallthru
        _
    $region52: #{conv2ds_forward_nchw.1} parent=5 // pred_fallthru
      _
    %p1235 = scmp.le.s32.totalorder 2, %s14
    // Predicated region
    $region57: #{conv2ds_forward_nchw.1} parent=5 // pred_check
      %p1236 = pneg %p1235
    $region58: #{conv2ds_forward_nchw.1} parent=5 // pred_check_branch
      %1238 = sbr.rel (%p1236) target = $region60
    $region59: #{conv2ds_forward_nchw.1} parent=5 // pred_region
      %s1239 = ssub.s32 %s14, 2
      // Predicated region
      $region61: #{conv2ds_forward_nchw.1} parent=59 // pred_check
        %p1240 = pneg %p216
      $region62: #{conv2ds_forward_nchw.1} parent=59 // pred_check_branch
        %1242 = sbr.rel (%p1240) target = $region64
      $region63: #{conv2ds_forward_nchw.1} parent=59 // pred_region
        %p1243 = scmp.lt.s32.totalorder %s20, 1
        %s1244 = scalar_select %p1243, %s20, 1
        %s1245 = smul.addr %s1244, 2
        %s1246 = smul.addr %s1245, 4
        %s1247 = scalar_lea.vmem %s8, %s1246
      $region64: #{conv2ds_forward_nchw.1} parent=59 // pred_fallthru
        _
    $region60: #{conv2ds_forward_nchw.1} parent=5 // pred_fallthru
      _
  $region6: #{conv2ds_forward_nchw.1} parent=0 // loop_footer
    %s18 = sadd.s32 1, %s14
  $region7: #{conv2ds_forward_nchw.1} parent=0 // loop_footer_branch
    %13 = sbr.rel target = $region3
  $region8: #{conv2ds_forward_nchw.1} parent=0 // loop_exit
    _

</llo_original>
